<compile_context>
chip_gen: v7x
topology: tpu7x:2x2x1
jax: 0.10.0
libtpu: 0.0.40
codegen_flags: <defaults>
</compile_context>

<pallas_src>
import math

import jax
import jax.numpy as jnp
from jax import lax
from jax.experimental import pallas as pl
from jax.experimental.pallas import tpu as pltpu

EPS = 1e-6
FF_CHUNK = 128                     # d_ff contraction chunk (lane-aligned)
VMEM_LIMIT = 56 * 1024 * 1024      # < 64 MiB physical on v7x; headroom on v5e/v6e


def _layernorm(h):
    """Reference LayerNormalization: scalar alpha=1 / bias=1, torch.std
    (unbiased, ddof=1), eps added to the std.  The divide is an (approx)
    EUP reciprocal so it does not occupy the VALU slot."""
    d = h.shape[-1]
    mean = jnp.mean(h, axis=-1, keepdims=True)
    var = jnp.sum((h - mean) ** 2, axis=-1, keepdims=True) * (1.0 / (d - 1))
    std = jnp.sqrt(var)
    return (h - mean) * pl.reciprocal(std + EPS, approx=True) + 1.0


# ---------------------------------------------------------------------------
# Kernel 1: layernorm + Q/K/V projections, tiled over (batch, seq tiles).
# ---------------------------------------------------------------------------
def _qkv_kernel(x_ref, wq_ref, bq_ref, wk_ref, bk_ref, wv_ref, bv_ref,
                q_ref, k_ref, v_ref):
    x = x_ref[0].astype(jnp.float32)                 # (TS, D)
    n1 = _layernorm(x).astype(jnp.bfloat16)          # bf16 MXU operands
    q = jnp.dot(n1, wq_ref[...], preferred_element_type=jnp.float32) + bq_ref[...]
    k = jnp.dot(n1, wk_ref[...], preferred_element_type=jnp.float32) + bk_ref[...]
    v = jnp.dot(n1, wv_ref[...], preferred_element_type=jnp.float32) + bv_ref[...]
    q_ref[0] = q.astype(q_ref.dtype)
    k_ref[0] = k.astype(k_ref.dtype)
    v_ref[0] = v.astype(v_ref.dtype)


# ---------------------------------------------------------------------------
# Kernel 2: flash attention (online softmax over KV tiles) + out-projection
# + residual 0 + layernorm + d_ff-chunked feed-forward + residual 1.
# Grid = (batch, q tiles, kv tiles); kv is the innermost (reduction) axis.
# ---------------------------------------------------------------------------
def _attn_ffn_kernel(x_ref, q_ref, k_ref, v_ref,
                     wo_ref, bo_ref, w1_ref, b1_ref, w2_ref, b2_ref,
                     out_ref, m_ref, l_ref, acc_ref):
    ki = pl.program_id(2)
    nk = pl.num_programs(2)
    d_model = q_ref.shape[-1]
    inv_sqrt_dk = 1.0 / math.sqrt(float(d_model))    # d_k == d_model in the ref

    @pl.when(ki == 0)
    def _init():
        m_ref[...] = jnp.full_like(m_ref, -jnp.inf)
        l_ref[...] = jnp.zeros_like(l_ref)
        acc_ref[...] = jnp.zeros_like(acc_ref)

    q = q_ref[0]                                     # (TQ, D)  bf16
    k = k_ref[0]                                     # (TKV, D) bf16
    v = v_ref[0]                                     # (TKV, D) bf16

    # scores = q @ k^T expressed as a contraction (no explicit transpose).
    scores = lax.dot_general(q, k, (((1,), (1,)), ((), ())),
                             preferred_element_type=jnp.float32) * inv_sqrt_dk
    # TODO(synk): src_mask is a no-op in the reference (masked_fill is called
    # out-of-place and discarded); apply it to `scores` here if masked
    # attention is actually intended.

    m_prev = m_ref[...]
    m_new = jnp.maximum(m_prev, jnp.max(scores, axis=-1, keepdims=True))
    alpha = jnp.exp(m_prev - m_new)
    p = jnp.exp(scores - m_new)                      # un-normalized probabilities
    l_ref[...] = alpha * l_ref[...] + jnp.sum(p, axis=-1, keepdims=True)
    acc_ref[...] = alpha * acc_ref[...] + jnp.dot(
        p.astype(jnp.bfloat16), v, preferred_element_type=jnp.float32)
    m_ref[...] = m_new

    @pl.when(ki == nk - 1)
    def _finalize():
        # Deferred softmax normalization: one (TQ, D) multiply by an EUP
        # reciprocal instead of dividing the full (TQ, S) score matrix.
        ctx = acc_ref[...] * pl.reciprocal(l_ref[...], approx=True)
        attn_out = jnp.dot(ctx.astype(jnp.bfloat16), wo_ref[...],
                           preferred_element_type=jnp.float32) + bo_ref[...]
        x1 = x_ref[0].astype(jnp.float32) + attn_out          # residual 0

        n2 = _layernorm(x1).astype(jnp.bfloat16)
        d_ff = w1_ref.shape[-1]
        ff = jnp.zeros((x1.shape[0], d_model), jnp.float32)
        # Chunk the d_ff contraction: only a (TQ, FF_CHUNK) slice of the
        # hidden activation is live at a time (exact — relu is elementwise,
        # the second matmul accumulates over d_ff).  Slices are static.
        for c in range(d_ff // FF_CHUNK):
            lo, hi = c * FF_CHUNK, (c + 1) * FF_CHUNK
            h1 = jnp.dot(n2, w1_ref[:, lo:hi],
                         preferred_element_type=jnp.float32) + b1_ref[:, lo:hi]
            h1 = jnp.maximum(h1, 0.0).astype(jnp.bfloat16)     # relu; dropout=id
            ff = ff + jnp.dot(h1, w2_ref[lo:hi, :],
                              preferred_element_type=jnp.float32)
        out_ref[0] = (x1 + ff + b2_ref[...]).astype(out_ref.dtype)   # residual 1


def _invariant_spec(shape, grid_rank):
    """BlockSpec for a grid-invariant operand (weight / bias): constant
    index_map + a single VMEM buffer (no pointless double-buffering)."""
    zeros = (0,) * len(shape)
    if grid_rank == 2:
        index_map = lambda b, s: zeros
    else:
        index_map = lambda b, qi, ki: zeros
    return pl.BlockSpec(shape, index_map, pipeline_mode=pl.Buffered(1))


def encoder_block(x, params, src_mask=None, *, tq=128, tkv=128):
    """x: (B, S, D) float32.  params: dict of pre-transposed (in, out) weights
    and (1, out) biases.  src_mask is accepted for API parity only (the
    reference's masked_fill is out-of-place, so it has no effect)."""
    del src_mask
    B, S, D = x.shape
    d_ff = params["w1"].shape[1]
    assert S % tq == 0 and S % tkv == 0, "S must divide into the seq tiles"
    assert D % 128 == 0 and d_ff % FF_CHUNK == 0, "keep last dims lane-dense"

    bf16, f32 = jnp.bfloat16, jnp.float32
    # bf16 weights: half the VMEM/HBM traffic and full MXU rate; f32 accumulate.
    wq, wk, wv, wo = (params[n].astype(bf16) for n in ("wq", "wk", "wv", "wo"))
    w1, w2 = params["w1"].astype(bf16), params["w2"].astype(bf16)
    bq, bk, bv, bo, b1, b2 = (params[n].astype(f32)
                              for n in ("bq", "bk", "bv", "bo", "b1", "b2"))

    # ---- kernel 1: layernorm + Q/K/V projections ---------------------------
    qkv_cost = pl.CostEstimate(
        flops=6 * B * S * D * D,
        transcendentals=B * S,
        bytes_accessed=B * S * D * 4 + 3 * (D * D * 2 + D * 4) + 3 * B * S * D * 2)
    q, k, v = pl.pallas_call(
        _qkv_kernel,
        out_shape=[jax.ShapeDtypeStruct((B, S, D), bf16)] * 3,
        grid_spec=pltpu.PrefetchScalarGridSpec(
            num_scalar_prefetch=0,
            grid=(B, S // tq),
            in_specs=[
                pl.BlockSpec((1, tq, D), lambda b, s: (b, s, 0)),          # x
                _invariant_spec((D, D), 2), _invariant_spec((1, D), 2),    # wq, bq
                _invariant_spec((D, D), 2), _invariant_spec((1, D), 2),    # wk, bk
                _invariant_spec((D, D), 2), _invariant_spec((1, D), 2),    # wv, bv
            ],
            out_specs=[pl.BlockSpec((1, tq, D), lambda b, s: (b, s, 0))] * 3,
        ),
        compiler_params=pltpu.CompilerParams(
            dimension_semantics=("parallel", "parallel"),
            vmem_limit_bytes=VMEM_LIMIT),
        cost_estimate=qkv_cost,
    )(x, wq, bq, wk, bk, wv, bv)

    # ---- kernel 2: flash attention + FFN fused with both residuals ---------
    attn_cost = pl.CostEstimate(
        flops=4 * B * S * S * D + 2 * B * S * D * D + 4 * B * S * D * d_ff,
        transcendentals=B * S * S + 4 * B * S,
        bytes_accessed=(2 * B * S * D * 4 + 3 * B * S * D * 2
                        + (D * D + 2 * D * d_ff) * 2 + (3 * D + d_ff) * 4))
    out = pl.pallas_call(
        _attn_ffn_kernel,
        out_shape=jax.ShapeDtypeStruct((B, S, D), x.dtype),
        grid_spec=pltpu.PrefetchScalarGridSpec(
            num_scalar_prefetch=0,
            grid=(B, S // tq, S // tkv),
            in_specs=[
                pl.BlockSpec((1, tq, D), lambda b, qi, ki: (b, qi, 0)),    # x
                pl.BlockSpec((1, tq, D), lambda b, qi, ki: (b, qi, 0)),    # q
                pl.BlockSpec((1, tkv, D), lambda b, qi, ki: (b, ki, 0)),   # k
                pl.BlockSpec((1, tkv, D), lambda b, qi, ki: (b, ki, 0)),   # v
                _invariant_spec((D, D), 3), _invariant_spec((1, D), 3),        # wo, bo
                _invariant_spec((D, d_ff), 3), _invariant_spec((1, d_ff), 3),  # w1, b1
                _invariant_spec((d_ff, D), 3), _invariant_spec((1, D), 3),     # w2, b2
            ],
            out_specs=pl.BlockSpec((1, tq, D), lambda b, qi, ki: (b, qi, 0)),
            scratch_shapes=[
                pltpu.VMEM((tq, 1), jnp.float32),   # running max  m
                pltpu.VMEM((tq, 1), jnp.float32),   # running sum  l
                pltpu.VMEM((tq, D), jnp.float32),   # un-normalized ctx accumulator
            ],
        ),
        compiler_params=pltpu.CompilerParams(
            dimension_semantics=("parallel", "parallel", "arbitrary"),
            vmem_limit_bytes=VMEM_LIMIT),
        cost_estimate=attn_cost,
    )(x, q, k, v, wo, bo, w1, b1, w2, b2)
    return out


def _reference(x, params):
    """Pure-JAX f32 reference with identical math, for a correctness check."""
    def ln(h):
        d = h.shape[-1]
        mean = jnp.mean(h, axis=-1, keepdims=True)
        var = jnp.sum((h - mean) ** 2, axis=-1, keepdims=True) / (d - 1)
        return (h - mean) / (jnp.sqrt(var) + EPS) + 1.0

    D = x.shape[-1]
    n1 = ln(x)
    q = n1 @ params["wq"] + params["bq"]
    k = n1 @ params["wk"] + params["bk"]
    v = n1 @ params["wv"] + params["bv"]
    scores = jnp.einsum("bqd,bkd->bqk", q, k) / math.sqrt(D)
    attn = jax.nn.softmax(scores, axis=-1)
    ctx = jnp.einsum("bqk,bkd->bqd", attn, v)
    x = x + (ctx @ params["wo"] + params["bo"])
    n2 = ln(x)
    h1 = jax.nn.relu(n2 @ params["w1"] + params["b1"])
    return x + (h1 @ params["w2"] + params["b2"])


if __name__ == "__main__":
    # D and d_ff are multiples of 128 so every block is lane-dense (the D=32
    # demo shape previously produced masked partial stores).  h = 1 is forced
    # by the reference module's d_k == d_model.
    B, S, D, D_FF = 2, 256, 128, 256
    TQ = TKV = 128

    key = jax.random.PRNGKey(0)
    keys = jax.random.split(key, 13)

    def w(k_, shape):
        return (0.02 * jax.random.normal(k_, shape)).astype(jnp.float32)

    # Linear weights stored pre-transposed as (in, out); biases as (1, out).
    params = {
        "wq": w(keys[0], (D, D)),     "bq": w(keys[1], (1, D)),
        "wk": w(keys[2], (D, D)),     "bk": w(keys[3], (1, D)),
        "wv": w(keys[4], (D, D)),     "bv": w(keys[5], (1, D)),
        "wo": w(keys[6], (D, D)),     "bo": w(keys[7], (1, D)),
        "w1": w(keys[8], (D, D_FF)),  "b1": w(keys[9], (1, D_FF)),
        "w2": w(keys[10], (D_FF, D)), "b2": w(keys[11], (1, D)),
    }
    x = jax.random.normal(keys[12], (B, S, D), dtype=jnp.float32)
    # src_mask exists in the PyTorch API but has no effect on the output
    # (masked_fill is not in-place in the reference); kept for API parity.
    src_mask = jnp.ones((B, 1, S, S), dtype=jnp.float32)

    out = encoder_block(x, params, src_mask, tq=TQ, tkv=TKV)
    out = jax.block_until_ready(out)

    ref = _reference(x, params)
    assert out.shape == (B, S, D)
    # bf16 MXU operands (f32 accumulation) + approx EUP reciprocals give
    # ~1e-3 abs deviation from the pure-f32 reference; tolerance loosened.
    max_err = float(jnp.max(jnp.abs(out - ref)))
    assert jnp.allclose(out, ref, atol=2e-2, rtol=2e-2), (
        f"mismatch vs reference (max abs err = {max_err})")
    print("KERNEL_OK")
</pallas_src>

<mosaic_0001>
module attributes {stable_mosaic.version = 11 : i64} {
  func.func @_qkv_kernel(%arg0: i32, %arg1: i32, %arg2: memref<1x128x128xf32, #tpu.memory_space<vmem>>, %arg3: memref<128x128xbf16, #tpu.memory_space<vmem>>, %arg4: memref<1x128xf32, #tpu.memory_space<vmem>>, %arg5: memref<128x128xbf16, #tpu.memory_space<vmem>>, %arg6: memref<1x128xf32, #tpu.memory_space<vmem>>, %arg7: memref<128x128xbf16, #tpu.memory_space<vmem>>, %arg8: memref<1x128xf32, #tpu.memory_space<vmem>>, %arg9: memref<1x128x128xbf16, #tpu.memory_space<vmem>>, %arg10: memref<1x128x128xbf16, #tpu.memory_space<vmem>>, %arg11: memref<1x128x128xbf16, #tpu.memory_space<vmem>>) attributes {dimension_semantics = [#tpu.dimension_semantics<parallel>, #tpu.dimension_semantics<parallel>], iteration_bounds = array<i64: 2, 2>, scalar_prefetch = 0 : i64, scratch_operands = 0 : i64, tpu.core_type = #tpu.core_type<tc>, window_params = [{transform_indices = @transform_0, window_bounds = array<i64: 1, 128, 128>}, {pipeline_mode = #tpu.pipeline_mode<synchronous>, transform_indices = @transform_1, window_bounds = array<i64: 128, 128>}, {pipeline_mode = #tpu.pipeline_mode<synchronous>, transform_indices = @transform_2, window_bounds = array<i64: 1, 128>}, {pipeline_mode = #tpu.pipeline_mode<synchronous>, transform_indices = @transform_3, window_bounds = array<i64: 128, 128>}, {pipeline_mode = #tpu.pipeline_mode<synchronous>, transform_indices = @transform_4, window_bounds = array<i64: 1, 128>}, {pipeline_mode = #tpu.pipeline_mode<synchronous>, transform_indices = @transform_5, window_bounds = array<i64: 128, 128>}, {pipeline_mode = #tpu.pipeline_mode<synchronous>, transform_indices = @transform_6, window_bounds = array<i64: 1, 128>}, {transform_indices = @transform_7, window_bounds = array<i64: 1, 128, 128>}, {transform_indices = @transform_8, window_bounds = array<i64: 1, 128, 128>}, {transform_indices = @transform_9, window_bounds = array<i64: 1, 128, 128>}]} {
    %c0 = arith.constant 0 : index
    %c0_0 = arith.constant 0 : index
    %c0_1 = arith.constant 0 : index
    %0 = vector.load %arg2[%c0, %c0_0, %c0_1] : memref<1x128x128xf32, #tpu.memory_space<vmem>>, vector<1x128x128xf32>
    %1 = vector.shape_cast %0 : vector<1x128x128xf32> to vector<128x128xf32>
    %cst = arith.constant dense<0.000000e+00> : vector<128xf32>
    %2 = vector.multi_reduction <add>, %1, %cst [1] : vector<128x128xf32> to vector<128xf32>
    %3 = vector.shape_cast %2 : vector<128xf32> to vector<128x1xf32>
    %cst_2 = arith.constant 1.280000e+02 : f32
    %4 = vector.broadcast %cst_2 : f32 to vector<128x1xf32>
    %5 = arith.divf %3, %4 : vector<128x1xf32>
    %6 = vector.broadcast %5 : vector<128x1xf32> to vector<128x128xf32>
    %7 = arith.subf %1, %6 : vector<128x128xf32>
    %8 = arith.mulf %7, %7 : vector<128x128xf32>
    %cst_3 = arith.constant dense<0.000000e+00> : vector<128xf32>
    %9 = vector.multi_reduction <add>, %8, %cst_3 [1] : vector<128x128xf32> to vector<128xf32>
    %10 = vector.shape_cast %9 : vector<128xf32> to vector<128x1xf32>
    %cst_4 = arith.constant 0.00787401571 : f32
    %11 = vector.broadcast %cst_4 : f32 to vector<128x1xf32>
    %12 = arith.mulf %10, %11 : vector<128x1xf32>
    %13 = math.sqrt %12 : vector<128x1xf32>
    %14 = vector.broadcast %5 : vector<128x1xf32> to vector<128x128xf32>
    %15 = arith.subf %1, %14 : vector<128x128xf32>
    %cst_5 = arith.constant 9.99999997E-7 : f32
    %16 = vector.broadcast %cst_5 : f32 to vector<128x1xf32>
    %17 = arith.addf %13, %16 : vector<128x1xf32>
    %18 = tpu.reciprocal %17 {approx = true} : vector<128x1xf32> -> vector<128x1xf32>
    %19 = vector.broadcast %18 : vector<128x1xf32> to vector<128x128xf32>
    %20 = arith.mulf %15, %19 : vector<128x128xf32>
    %cst_6 = arith.constant 1.000000e+00 : f32
    %21 = vector.broadcast %cst_6 : f32 to vector<128x128xf32>
    %22 = arith.addf %20, %21 : vector<128x128xf32>
    %23 = arith.truncf %22 : vector<128x128xf32> to vector<128x128xbf16>
    %c0_7 = arith.constant 0 : index
    %c0_8 = arith.constant 0 : index
    %24 = vector.load %arg3[%c0_7, %c0_8] : memref<128x128xbf16, #tpu.memory_space<vmem>>, vector<128x128xbf16>
    %cst_9 = arith.constant dense<0.000000e+00> : vector<128x128xf32>
    %25 = tpu.matmul %23, %24, %cst_9 {dimension_numbers = #tpu.dot_dimension_numbers<[1], [0], [0], [1], [0, 0, 1, 1], [], []>} : vector<128x128xbf16>, vector<128x128xbf16>, vector<128x128xf32> -> vector<128x128xf32>
    %c0_10 = arith.constant 0 : index
    %c0_11 = arith.constant 0 : index
    %26 = vector.load %arg4[%c0_10, %c0_11] : memref<1x128xf32, #tpu.memory_space<vmem>>, vector<1x128xf32>
    %27 = vector.broadcast %26 : vector<1x128xf32> to vector<128x128xf32>
    %28 = arith.addf %25, %27 : vector<128x128xf32>
    %c0_12 = arith.constant 0 : index
    %c0_13 = arith.constant 0 : index
    %29 = vector.load %arg5[%c0_12, %c0_13] : memref<128x128xbf16, #tpu.memory_space<vmem>>, vector<128x128xbf16>
    %cst_14 = arith.constant dense<0.000000e+00> : vector<128x128xf32>
    %30 = tpu.matmul %23, %29, %cst_14 {dimension_numbers = #tpu.dot_dimension_numbers<[1], [0], [0], [1], [0, 0, 1, 1], [], []>} : vector<128x128xbf16>, vector<128x128xbf16>, vector<128x128xf32> -> vector<128x128xf32>
    %c0_15 = arith.constant 0 : index
    %c0_16 = arith.constant 0 : index
    %31 = vector.load %arg6[%c0_15, %c0_16] : memref<1x128xf32, #tpu.memory_space<vmem>>, vector<1x128xf32>
    %32 = vector.broadcast %31 : vector<1x128xf32> to vector<128x128xf32>
    %33 = arith.addf %30, %32 : vector<128x128xf32>
    %c0_17 = arith.constant 0 : index
    %c0_18 = arith.constant 0 : index
    %34 = vector.load %arg7[%c0_17, %c0_18] : memref<128x128xbf16, #tpu.memory_space<vmem>>, vector<128x128xbf16>
    %cst_19 = arith.constant dense<0.000000e+00> : vector<128x128xf32>
    %35 = tpu.matmul %23, %34, %cst_19 {dimension_numbers = #tpu.dot_dimension_numbers<[1], [0], [0], [1], [0, 0, 1, 1], [], []>} : vector<128x128xbf16>, vector<128x128xbf16>, vector<128x128xf32> -> vector<128x128xf32>
    %c0_20 = arith.constant 0 : index
    %c0_21 = arith.constant 0 : index
    %36 = vector.load %arg8[%c0_20, %c0_21] : memref<1x128xf32, #tpu.memory_space<vmem>>, vector<1x128xf32>
    %37 = vector.broadcast %36 : vector<1x128xf32> to vector<128x128xf32>
    %38 = arith.addf %35, %37 : vector<128x128xf32>
    %39 = arith.truncf %28 : vector<128x128xf32> to vector<128x128xbf16>
    %c0_22 = arith.constant 0 : index
    %c0_23 = arith.constant 0 : index
    %c0_24 = arith.constant 0 : index
    %40 = vector.load %arg9[%c0_22, %c0_23, %c0_24] : memref<1x128x128xbf16, #tpu.memory_space<vmem>>, vector<1x128x128xbf16>
    %41 = vector.shape_cast %40 : vector<1x128x128xbf16> to vector<128x128xbf16>
    %42 = vector.shape_cast %39 : vector<128x128xbf16> to vector<1x128x128xbf16>
    tpu.vector_store %arg9[%c0_22, %c0_23, %c0_24], %42 {strides = array<i32>} : memref<1x128x128xbf16, #tpu.memory_space<vmem>>, vector<1x128x128xbf16>,
    %43 = arith.truncf %33 : vector<128x128xf32> to vector<128x128xbf16>
    %c0_25 = arith.constant 0 : index
    %c0_26 = arith.constant 0 : index
    %c0_27 = arith.constant 0 : index
    %44 = vector.load %arg10[%c0_25, %c0_26, %c0_27] : memref<1x128x128xbf16, #tpu.memory_space<vmem>>, vector<1x128x128xbf16>
    %45 = vector.shape_cast %44 : vector<1x128x128xbf16> to vector<128x128xbf16>
    %46 = vector.shape_cast %43 : vector<128x128xbf16> to vector<1x128x128xbf16>
    tpu.vector_store %arg10[%c0_25, %c0_26, %c0_27], %46 {strides = array<i32>} : memref<1x128x128xbf16, #tpu.memory_space<vmem>>, vector<1x128x128xbf16>,
    %47 = arith.truncf %38 : vector<128x128xf32> to vector<128x128xbf16>
    %c0_28 = arith.constant 0 : index
    %c0_29 = arith.constant 0 : index
    %c0_30 = arith.constant 0 : index
    %48 = vector.load %arg11[%c0_28, %c0_29, %c0_30] : memref<1x128x128xbf16, #tpu.memory_space<vmem>>, vector<1x128x128xbf16>
    %49 = vector.shape_cast %48 : vector<1x128x128xbf16> to vector<128x128xbf16>
    %50 = vector.shape_cast %47 : vector<128x128xbf16> to vector<1x128x128xbf16>
    tpu.vector_store %arg11[%c0_28, %c0_29, %c0_30], %50 {strides = array<i32>} : memref<1x128x128xbf16, #tpu.memory_space<vmem>>, vector<1x128x128xbf16>,
    return
  }
  func.func @transform_0(%arg0: i32, %arg1: i32) -> (i32, i32, i32) {
    %c0_i32 = arith.constant 0 : i32
    %c0_i32_0 = arith.constant 0 : i32
    return %arg0, %arg1, %c0_i32 : i32, i32, i32
  }
  func.func @transform_1(%arg0: i32, %arg1: i32) -> (i32, i32) {
    %c0_i32 = arith.constant 0 : i32
    %c0_i32_0 = arith.constant 0 : i32
    %c0_i32_1 = arith.constant 0 : i32
    return %c0_i32, %c0_i32_0 : i32, i32
  }
  func.func @transform_2(%arg0: i32, %arg1: i32) -> (i32, i32) {
    %c0_i32 = arith.constant 0 : i32
    %c0_i32_0 = arith.constant 0 : i32
    %c0_i32_1 = arith.constant 0 : i32
    return %c0_i32, %c0_i32_0 : i32, i32
  }
  func.func @transform_3(%arg0: i32, %arg1: i32) -> (i32, i32) {
    %c0_i32 = arith.constant 0 : i32
    %c0_i32_0 = arith.constant 0 : i32
    %c0_i32_1 = arith.constant 0 : i32
    return %c0_i32, %c0_i32_0 : i32, i32
  }
  func.func @transform_4(%arg0: i32, %arg1: i32) -> (i32, i32) {
    %c0_i32 = arith.constant 0 : i32
    %c0_i32_0 = arith.constant 0 : i32
    %c0_i32_1 = arith.constant 0 : i32
    return %c0_i32, %c0_i32_0 : i32, i32
  }
  func.func @transform_5(%arg0: i32, %arg1: i32) -> (i32, i32) {
    %c0_i32 = arith.constant 0 : i32
    %c0_i32_0 = arith.constant 0 : i32
    %c0_i32_1 = arith.constant 0 : i32
    return %c0_i32, %c0_i32_0 : i32, i32
  }
  func.func @transform_6(%arg0: i32, %arg1: i32) -> (i32, i32) {
    %c0_i32 = arith.constant 0 : i32
    %c0_i32_0 = arith.constant 0 : i32
    %c0_i32_1 = arith.constant 0 : i32
    return %c0_i32, %c0_i32_0 : i32, i32
  }
  func.func @transform_7(%arg0: i32, %arg1: i32) -> (i32, i32, i32) {
    %c0_i32 = arith.constant 0 : i32
    %c0_i32_0 = arith.constant 0 : i32
    return %arg0, %arg1, %c0_i32 : i32, i32, i32
  }
  func.func @transform_8(%arg0: i32, %arg1: i32) -> (i32, i32, i32) {
    %c0_i32 = arith.constant 0 : i32
    %c0_i32_0 = arith.constant 0 : i32
    return %arg0, %arg1, %c0_i32 : i32, i32, i32
  }
  func.func @transform_9(%arg0: i32, %arg1: i32) -> (i32, i32, i32) {
    %c0_i32 = arith.constant 0 : i32
    %c0_i32_0 = arith.constant 0 : i32
    return %arg0, %arg1, %c0_i32 : i32, i32, i32
  }
}

</mosaic_0001>

<llo_original>
// kernel: tpu_custom_call.1
$region0: #{tpu_custom_call.1}
  #allocation0 [shape = 'u32[]', space=smem, size = 0x4, offset = 0x4, fixed_abs, tag = 'smem constant byte address 0x4 - core index']
  #allocation1 [shape = 'u32[144,128]{1,0:T(1,128)}', space=vmem, size = 0x12000, scoped, tag = 'internal scratch']
  %s0 = inlined_call_operand.hbm [shape: f32[2,256,128], index: 0, kind: input, shape index: {}]
  %s1 = inlined_call_operand.hbm [shape: bf16[128,128], index: 1, kind: input, shape index: {}]
  %s2 = inlined_call_operand.vmem [shape: f32[1,128], index: 2, kind: input, shape index: {}]
  %s3 = inlined_call_operand.hbm [shape: bf16[128,128], index: 3, kind: input, shape index: {}]
  %s4 = inlined_call_operand.vmem [shape: f32[1,128], index: 4, kind: input, shape index: {}]
  %s5 = inlined_call_operand.hbm [shape: bf16[128,128], index: 5, kind: input, shape index: {}]
  %s6 = inlined_call_operand.vmem [shape: f32[1,128], index: 6, kind: input, shape index: {}]
  %s7 = inlined_call_operand.hbm [shape: bf16[2,256,128], index: 7, kind: output, shape index: {0}]
  %s8 = inlined_call_operand.hbm [shape: bf16[2,256,128], index: 8, kind: output, shape index: {1}]
  %s9 = inlined_call_operand.hbm [shape: bf16[2,256,128], index: 9, kind: output, shape index: {2}]
  %10 = xla_tuple %s7, %s8, %s9
  %s11 = sld [smem:[#allocation0]]
  $region93: #{tpu_custom_call.1} parent=0
    _
  %s13 = ssub.s32 1, %s11
  %s14 = scalar_select 0, %s13, %s11
  $region1: #{tpu_custom_call.1} parent=0
    #allocation2 [shape = 'u8[131072]{0}', space=vmem, size = 0x20000, scoped, tag = 'input window, operand 0']
    #allocation3 [shape = 's32[2]{0}', space=sflag, size = 0x8, scoped, tag = 'scoped memory for tpu_custom_call.1']
    #allocation4 [shape = 's32[2]{0}', space=sflag, size = 0x8, scoped, tag = 'scoped memory for tpu_custom_call.1']
    #allocation5 [shape = 'u8[32768]{0}', space=vmem, size = 0x8000, scoped, tag = 'input window, operand 1, single buffered']
    #allocation6 [shape = 's32[1]{0}', space=sflag, size = 0x4, scoped, tag = 'scoped memory for tpu_custom_call.1']
    #allocation7 [shape = 'u8[32768]{0}', space=vmem, size = 0x8000, scoped, tag = 'input window, operand 3, single buffered']
    #allocation8 [shape = 'u8[32768]{0}', space=vmem, size = 0x8000, scoped, tag = 'input window, operand 5, single buffered']
    #allocation9 [shape = 's32[1]{0}', space=sflag, size = 0x4, scoped, tag = 'scoped memory for tpu_custom_call.1']
    #allocation10 [shape = 'u8[65536]{0}', space=vmem, size = 0x10000, scoped, tag = 'output window, operand 0']
    #allocation11 [shape = 'u8[65536]{0}', space=vmem, size = 0x10000, scoped, tag = 'output window, operand 1']
    #allocation12 [shape = 's32[2]{0}', space=sflag, size = 0x8, scoped, tag = 'scoped memory for tpu_custom_call.1']
    #allocation13 [shape = 'u8[65536]{0}', space=vmem, size = 0x10000, scoped, tag = 'output window, operand 2']
    %15 = vsyncpa [#allocation3], 0
    %s16 = scalar_lea.sflag [#allocation3], 1
    %17 = vsyncpa %s16, 0
    %18 = vsyncpa [#allocation6], 0
    %19 = vsyncpa [#allocation9], 0
    %20 = vsyncpa [#allocation4], 0
    %s21 = scalar_lea.sflag [#allocation4], 1
    %22 = vsyncpa %s21, 0
    %23 = vsyncpa [#allocation12], 0
    %s24 = scalar_lea.sflag [#allocation12], 1
    %25 = vsyncpa %s24, 0
    loop: start=0, step=1, limit=6
    $region2: #{tpu_custom_call.1} parent=1 // loop_pre_header
      _
    $region3: #{tpu_custom_call.1} parent=1 // loop_header
      %s27 = sphi 0, %s31
      %p28 = scmp.ge.s32.totalorder %s27, 6
      %s34 = sphi 0, %s46
      %s35 = sphi 0, %s42
      %s36 = sphi 0, %s34
      %s37 = sphi 0, %s35
      %s38 = sphi 0, %s36
      %s39 = sphi 0, %s37
      %s51 = sphi 0, %s53
      %s54 = sphi 0, %s51
      %s55 = sphi 0, %s54
      %s71 = sphi 0, %s55
      %s75 = sphi 0, %s75
      %s77 = sphi 0, %s75
      %s78 = sphi 0, %s77
      %s92 = sphi 0, %s78
      %s96 = sphi 0, %s96
      %s98 = sphi 0, %s96
      %s99 = sphi 0, %s98
      %s113 = sphi 0, %s99
      %s117 = sphi 0, %s117
      %s119 = sphi 0, %s117
      %s120 = sphi 0, %s119
      %s134 = sphi 0, %s120
      %s138 = sphi 0, %s138
      %s140 = sphi 0, %s138
      %s141 = sphi 0, %s140
      %s155 = sphi 0, %s141
      %s159 = sphi 0, %s159
      %s161 = sphi 0, %s159
      %s162 = sphi 0, %s161
      %s176 = sphi 0, %s162
      %s180 = sphi 0, %s180
      %s182 = sphi 0, %s180
      %s183 = sphi 0, %s182
      %s197 = sphi 0, %s183
      %s205 = sphi 0, %s207
      %s208 = sphi 0, %s205
      %s209 = sphi 0, %s208
      %s225 = sphi 0, %s209
      %s233 = sphi 0, %s235
      %s236 = sphi 0, %s233
      %s237 = sphi 0, %s236
      %s253 = sphi 0, %s237
      %s261 = sphi 0, %s263
      %s264 = sphi 0, %s261
      %s265 = sphi 0, %s264
      %s281 = sphi 0, %s265
    $region4: #{tpu_custom_call.1} parent=1 // loop_header_branch
      %30 = sbr.rel (%p28) target = $region8
    $region5: #{tpu_custom_call.1} parent=1 // loop_body
      %s32 = ssub.s32 %s27, 1
      %s33 = ssub.s32 %s27, 2
      %s40 = sadd.s32 1, %s35
      %p41 = scmp.ge.s32.totalorder %s40, 2
      %s42 = scalar_select %p41, 0, %s40
      %s43 = sadd.s32 1, %s34
      %s44 = scalar_select %p41, %s43, %s34
      %p45 = scmp.ge.s32.totalorder %s44, 2
      %s46 = scalar_select %p45, 0, %s44
      %s47 = ssub.s32 %s34, %s46
      %s48 = ssub.s32 %s35, %s42
      %s49 = sor.u32 %s47, %s48
      %p50 = scmp.eq.s32.totalorder %s49, 0
      %s52 = sadd.s32 %s51, 1
      %s53 = scalar_select %p50, %s51, %s52
      %p56 = pneg %p50
      %p57 = scmp.eq.s32.totalorder %s27, 3
      %p58 = por %p56, %p57
      %p59 = scmp.ne.s32.totalorder %s51, %s54
      %p60 = scmp.eq.s32.totalorder %s27, 0
      %p61 = por %p59, %p60
      %p62 = scmp.ne.s32.totalorder %s51, %s54
      %p63 = scmp.eq.s32.totalorder %s32, 3
      %p64 = por %p62, %p63
      %p65 = scmp.ne.s32.totalorder %s54, %s55
      %p66 = scmp.eq.s32.totalorder %s32, 0
      %p67 = por %p65, %p66
      %p68 = scmp.ne.s32.totalorder %s54, %s55
      %p69 = scmp.eq.s32.totalorder %s33, 3
      %p70 = por %p68, %p69
      %p72 = scmp.ne.s32.totalorder %s55, %s71
      %p73 = scmp.eq.s32.totalorder %s33, 0
      %p74 = por %p72, %p73
      %s76 = sadd.s32 %s75, 1
      %p79 = scmp.eq.s32.totalorder %s27, 3
      %p80 = scmp.ne.s32.totalorder %s75, %s77
      %p81 = scmp.eq.s32.totalorder %s27, 0
      %p82 = por %p80, %p81
      %p83 = scmp.ne.s32.totalorder %s75, %s77
      %p84 = scmp.eq.s32.totalorder %s32, 3
      %p85 = por %p83, %p84
      %p86 = scmp.ne.s32.totalorder %s77, %s78
      %p87 = scmp.eq.s32.totalorder %s32, 0
      %p88 = por %p86, %p87
      %p89 = scmp.ne.s32.totalorder %s77, %s78
      %p90 = scmp.eq.s32.totalorder %s33, 3
      %p91 = por %p89, %p90
      %p93 = scmp.ne.s32.totalorder %s78, %s92
      %p94 = scmp.eq.s32.totalorder %s33, 0
      %p95 = por %p93, %p94
      %s97 = sadd.s32 %s96, 1
      %p100 = scmp.eq.s32.totalorder %s27, 3
      %p101 = scmp.ne.s32.totalorder %s96, %s98
      %p102 = scmp.eq.s32.totalorder %s27, 0
      %p103 = por %p101, %p102
      %p104 = scmp.ne.s32.totalorder %s96, %s98
      %p105 = scmp.eq.s32.totalorder %s32, 3
      %p106 = por %p104, %p105
      %p107 = scmp.ne.s32.totalorder %s98, %s99
      %p108 = scmp.eq.s32.totalorder %s32, 0
      %p109 = por %p107, %p108
      %p110 = scmp.ne.s32.totalorder %s98, %s99
      %p111 = scmp.eq.s32.totalorder %s33, 3
      %p112 = por %p110, %p111
      %p114 = scmp.ne.s32.totalorder %s99, %s113
      %p115 = scmp.eq.s32.totalorder %s33, 0
      %p116 = por %p114, %p115
      %s118 = sadd.s32 %s117, 1
      %p121 = scmp.eq.s32.totalorder %s27, 3
      %p122 = scmp.ne.s32.totalorder %s117, %s119
      %p123 = scmp.eq.s32.totalorder %s27, 0
      %p124 = por %p122, %p123
      %p125 = scmp.ne.s32.totalorder %s117, %s119
      %p126 = scmp.eq.s32.totalorder %s32, 3
      %p127 = por %p125, %p126
      %p128 = scmp.ne.s32.totalorder %s119, %s120
      %p129 = scmp.eq.s32.totalorder %s32, 0
      %p130 = por %p128, %p129
      %p131 = scmp.ne.s32.totalorder %s119, %s120
      %p132 = scmp.eq.s32.totalorder %s33, 3
      %p133 = por %p131, %p132
      %p135 = scmp.ne.s32.totalorder %s120, %s134
      %p136 = scmp.eq.s32.totalorder %s33, 0
      %p137 = por %p135, %p136
      %s139 = sadd.s32 %s138, 1
      %p142 = scmp.eq.s32.totalorder %s27, 3
      %p143 = scmp.ne.s32.totalorder %s138, %s140
      %p144 = scmp.eq.s32.totalorder %s27, 0
      %p145 = por %p143, %p144
      %p146 = scmp.ne.s32.totalorder %s138, %s140
      %p147 = scmp.eq.s32.totalorder %s32, 3
      %p148 = por %p146, %p147
      %p149 = scmp.ne.s32.totalorder %s140, %s141
      %p150 = scmp.eq.s32.totalorder %s32, 0
      %p151 = por %p149, %p150
      %p152 = scmp.ne.s32.totalorder %s140, %s141
      %p153 = scmp.eq.s32.totalorder %s33, 3
      %p154 = por %p152, %p153
      %p156 = scmp.ne.s32.totalorder %s141, %s155
      %p157 = scmp.eq.s32.totalorder %s33, 0
      %p158 = por %p156, %p157
      %s160 = sadd.s32 %s159, 1
      %p163 = scmp.eq.s32.totalorder %s27, 3
      %p164 = scmp.ne.s32.totalorder %s159, %s161
      %p165 = scmp.eq.s32.totalorder %s27, 0
      %p166 = por %p164, %p165
      %p167 = scmp.ne.s32.totalorder %s159, %s161
      %p168 = scmp.eq.s32.totalorder %s32, 3
      %p169 = por %p167, %p168
      %p170 = scmp.ne.s32.totalorder %s161, %s162
      %p171 = scmp.eq.s32.totalorder %s32, 0
      %p172 = por %p170, %p171
      %p173 = scmp.ne.s32.totalorder %s161, %s162
      %p174 = scmp.eq.s32.totalorder %s33, 3
      %p175 = por %p173, %p174
      %p177 = scmp.ne.s32.totalorder %s162, %s176
      %p178 = scmp.eq.s32.totalorder %s33, 0
      %p179 = por %p177, %p178
      %s181 = sadd.s32 %s180, 1
      %p184 = scmp.eq.s32.totalorder %s27, 3
      %p185 = scmp.ne.s32.totalorder %s180, %s182
      %p186 = scmp.eq.s32.totalorder %s27, 0
      %p187 = por %p185, %p186
      %p188 = scmp.ne.s32.totalorder %s180, %s182
      %p189 = scmp.eq.s32.totalorder %s32, 3
      %p190 = por %p188, %p189
      %p191 = scmp.ne.s32.totalorder %s182, %s183
      %p192 = scmp.eq.s32.totalorder %s32, 0
      %p193 = por %p191, %p192
      %p194 = scmp.ne.s32.totalorder %s182, %s183
      %p195 = scmp.eq.s32.totalorder %s33, 3
      %p196 = por %p194, %p195
      %p198 = scmp.ne.s32.totalorder %s183, %s197
      %p199 = scmp.eq.s32.totalorder %s33, 0
      %p200 = por %p198, %p199
      %s201 = ssub.s32 %s34, %s46
      %s202 = ssub.s32 %s35, %s42
      %s203 = sor.u32 %s201, %s202
      %p204 = scmp.eq.s32.totalorder %s203, 0
      %s206 = sadd.s32 %s205, 1
      %s207 = scalar_select %p204, %s205, %s206
      %p210 = pneg %p204
      %p211 = scmp.eq.s32.totalorder %s27, 3
      %p212 = por %p210, %p211
      %p213 = scmp.ne.s32.totalorder %s205, %s208
      %p214 = scmp.eq.s32.totalorder %s27, 0
      %p215 = por %p213, %p214
      %p216 = scmp.ne.s32.totalorder %s205, %s208
      %p217 = scmp.eq.s32.totalorder %s32, 3
      %p218 = por %p216, %p217
      %p219 = scmp.ne.s32.totalorder %s208, %s209
      %p220 = scmp.eq.s32.totalorder %s32, 0
      %p221 = por %p219, %p220
      %p222 = scmp.ne.s32.totalorder %s208, %s209
      %p223 = scmp.eq.s32.totalorder %s33, 3
      %p224 = por %p222, %p223
      %p226 = scmp.ne.s32.totalorder %s209, %s225
      %p227 = scmp.eq.s32.totalorder %s33, 0
      %p228 = por %p226, %p227
      %s229 = ssub.s32 %s34, %s46
      %s230 = ssub.s32 %s35, %s42
      %s231 = sor.u32 %s229, %s230
      %p232 = scmp.eq.s32.totalorder %s231, 0
      %s234 = sadd.s32 %s233, 1
      %s235 = scalar_select %p232, %s233, %s234
      %p238 = pneg %p232
      %p239 = scmp.eq.s32.totalorder %s27, 3
      %p240 = por %p238, %p239
      %p241 = scmp.ne.s32.totalorder %s233, %s236
      %p242 = scmp.eq.s32.totalorder %s27, 0
      %p243 = por %p241, %p242
      %p244 = scmp.ne.s32.totalorder %s233, %s236
      %p245 = scmp.eq.s32.totalorder %s32, 3
      %p246 = por %p244, %p245
      %p247 = scmp.ne.s32.totalorder %s236, %s237
      %p248 = scmp.eq.s32.totalorder %s32, 0
      %p249 = por %p247, %p248
      %p250 = scmp.ne.s32.totalorder %s236, %s237
      %p251 = scmp.eq.s32.totalorder %s33, 3
      %p252 = por %p250, %p251
      %p254 = scmp.ne.s32.totalorder %s237, %s253
      %p255 = scmp.eq.s32.totalorder %s33, 0
      %p256 = por %p254, %p255
      %s257 = ssub.s32 %s34, %s46
      %s258 = ssub.s32 %s35, %s42
      %s259 = sor.u32 %s257, %s258
      %p260 = scmp.eq.s32.totalorder %s259, 0
      %s262 = sadd.s32 %s261, 1
      %s263 = scalar_select %p260, %s261, %s262
      %p266 = pneg %p260
      %p267 = scmp.eq.s32.totalorder %s27, 3
      %p268 = por %p266, %p267
      %p269 = scmp.ne.s32.totalorder %s261, %s264
      %p270 = scmp.eq.s32.totalorder %s27, 0
      %p271 = por %p269, %p270
      %p272 = scmp.ne.s32.totalorder %s261, %s264
      %p273 = scmp.eq.s32.totalorder %s32, 3
      %p274 = por %p272, %p273
      %p275 = scmp.ne.s32.totalorder %s264, %s265
      %p276 = scmp.eq.s32.totalorder %s32, 0
      %p277 = por %p275, %p276
      %p278 = scmp.ne.s32.totalorder %s264, %s265
      %p279 = scmp.eq.s32.totalorder %s33, 3
      %p280 = por %p278, %p279
      %p282 = scmp.ne.s32.totalorder %s265, %s281
      %p283 = scmp.eq.s32.totalorder %s33, 0
      %p284 = por %p282, %p283
      %p285 = scmp.le.s32.totalorder 1, %s27
      %p286 = scmp.lt.s32.totalorder %s27, 5
      %p287 = pnand %p285, %p286
      %p288 = pneg %p287
      // Predicated region
      $region9: #{tpu_custom_call.1} parent=5 // pred_check
        _
      $region10: #{tpu_custom_call.1} parent=5 // pred_check_branch
        %290 = sbr.rel (%p287) target = $region12
      $region11: #{tpu_custom_call.1} parent=5 // pred_region
        %s291 = ssub.s32 %s27, 1
        // Predicated region
        $region13: #{tpu_custom_call.1} parent=11 // pred_check
          %p292 = pneg %p88
        $region14: #{tpu_custom_call.1} parent=11 // pred_check_branch
          %294 = sbr.rel (%p292) target = $region16
        $region15: #{tpu_custom_call.1} parent=11 // pred_region
          %s296 = ssub.s32 1024, 1024
          %297 = vsyncadd [#allocation6], %s296
          %s298 = sshll.u32 [#allocation5], 4
          %s299 = int_to_ptr.vmem [resolvable:$true] %s298
          %304 = dma.hbm_to_vmem [thread:$0]  %s1, 1024, %s299, [#allocation6], 64, 64, 4
        $region16: #{tpu_custom_call.1} parent=11 // pred_fallthru
          _
        // Predicated region
        $region17: #{tpu_custom_call.1} parent=11 // pred_check
          %p305 = pneg %p109
        $region18: #{tpu_custom_call.1} parent=11 // pred_check_branch
          %307 = sbr.rel (%p305) target = $region20
        $region19: #{tpu_custom_call.1} parent=11 // pred_region
          _
        $region20: #{tpu_custom_call.1} parent=11 // pred_fallthru
          _
        // Predicated region
        $region21: #{tpu_custom_call.1} parent=11 // pred_check
          %p308 = pneg %p130
        $region22: #{tpu_custom_call.1} parent=11 // pred_check_branch
          %310 = sbr.rel (%p308) target = $region24
        $region23: #{tpu_custom_call.1} parent=11 // pred_region
          %s312 = ssub.s32 1024, 1024
          %313 = vsyncadd [#allocation6], %s312
          %s314 = sshll.u32 [#allocation7], 4
          %s315 = int_to_ptr.vmem [resolvable:$true] %s314
          %320 = dma.hbm_to_vmem [thread:$0]  %s3, 1024, %s315, [#allocation6], 64, 64, 4
        $region24: #{tpu_custom_call.1} parent=11 // pred_fallthru
          _
        // Predicated region
        $region25: #{tpu_custom_call.1} parent=11 // pred_check
          %p321 = pneg %p151
        $region26: #{tpu_custom_call.1} parent=11 // pred_check_branch
          %323 = sbr.rel (%p321) target = $region28
        $region27: #{tpu_custom_call.1} parent=11 // pred_region
          _
        $region28: #{tpu_custom_call.1} parent=11 // pred_fallthru
          _
        // Predicated region
        $region29: #{tpu_custom_call.1} parent=11 // pred_check
          %p324 = pneg %p172
        $region30: #{tpu_custom_call.1} parent=11 // pred_check_branch
          %326 = sbr.rel (%p324) target = $region32
        $region31: #{tpu_custom_call.1} parent=11 // pred_region
          %s328 = ssub.s32 1024, 1024
          %329 = vsyncadd [#allocation9], %s328
          %s330 = sshll.u32 [#allocation8], 4
          %s331 = int_to_ptr.vmem [resolvable:$true] %s330
          %336 = dma.hbm_to_vmem [thread:$0]  %s5, 1024, %s331, [#allocation9], 64, 64, 4
        $region32: #{tpu_custom_call.1} parent=11 // pred_fallthru
          _
        // Predicated region
        $region33: #{tpu_custom_call.1} parent=11 // pred_check
          %p337 = pneg %p193
        $region34: #{tpu_custom_call.1} parent=11 // pred_check_branch
          %339 = sbr.rel (%p337) target = $region36
        $region35: #{tpu_custom_call.1} parent=11 // pred_region
          _
        $region36: #{tpu_custom_call.1} parent=11 // pred_fallthru
          _
      $region12: #{tpu_custom_call.1} parent=5 // pred_fallthru
        _
      %p340 = scmp.lt.s32.totalorder %s27, 4
      // Predicated region
      $region37: #{tpu_custom_call.1} parent=5 // pred_check
        %p341 = pneg %p340
      $region38: #{tpu_custom_call.1} parent=5 // pred_check_branch
        %343 = sbr.rel (%p341) target = $region40
      $region39: #{tpu_custom_call.1} parent=5 // pred_region
        // Predicated region
        $region41: #{tpu_custom_call.1} parent=39 // pred_check
          %p344 = pneg %p61
        $region42: #{tpu_custom_call.1} parent=39 // pred_check_branch
          %346 = sbr.rel (%p344) target = $region44
        $region43: #{tpu_custom_call.1} parent=39 // pred_region
          %s347 = sand.u32 %s51, 1
          %s348 = scalar_lea.sflag [#allocation3], %s347
          %s349 = sand.u32 %s51, 1
          %s350 = smul.addr %s349, 128
          %s351 = scalar_lea.vmem [#allocation2], %s350
          %s352 = smul.u32 16, %s35
          %s354 = ssub.s32 2048, 2048
          %355 = vsyncadd %s348, %s354
          %s356 = smul.addr %s34, 32
          %s357 = sadd.s32 %s352, %s356
          %s358 = smul.addr %s357, 128
          %s359 = scalar_lea.hbm %s0, %s358
          %s360 = sshll.u32 %s351, 4
          %s361 = int_to_ptr.vmem [resolvable:$true] %s360
          %366 = dma.hbm_to_vmem [thread:$0]  %s359, 2048, %s361, %s348, 128, 128, 8
        $region44: #{tpu_custom_call.1} parent=39 // pred_fallthru
          _
      $region40: #{tpu_custom_call.1} parent=5 // pred_fallthru
        _
      %p367 = scmp.le.s32.totalorder 1, %s27
      %p368 = scmp.lt.s32.totalorder %s27, 5
      %p369 = pnand %p367, %p368
      %p370 = pneg %p369
      // Predicated region
      $region45: #{tpu_custom_call.1} parent=5 // pred_check
        _
      $region46: #{tpu_custom_call.1} parent=5 // pred_check_branch
        %372 = sbr.rel (%p369) target = $region48
      $region47: #{tpu_custom_call.1} parent=5 // pred_region
        %s373 = ssub.s32 %s27, 1
        %s374 = sand.u32 %s54, 1
        %s375 = scalar_lea.sflag [#allocation3], %s374
        %s376 = sand.u32 %s54, 1
        %s377 = smul.addr %s376, 128
        %s378 = scalar_lea.vmem [#allocation2], %s377
        // Predicated region
        $region49: #{tpu_custom_call.1} parent=47 // pred_check
          %p379 = pneg %p67
        $region50: #{tpu_custom_call.1} parent=47 // pred_check_branch
          %381 = sbr.rel (%p379) target = $region52
        $region51: #{tpu_custom_call.1} parent=47 // pred_region
          %382 = dma.done %s375, 2048
        $region52: #{tpu_custom_call.1} parent=47 // pred_fallthru
          _
        // Predicated region
        $region53: #{tpu_custom_call.1} parent=47 // pred_check
          %p383 = pneg %p88
        $region54: #{tpu_custom_call.1} parent=47 // pred_check_branch
          %385 = sbr.rel (%p383) target = $region56
        $region55: #{tpu_custom_call.1} parent=47 // pred_region
          %386 = dma.done [#allocation6], 1024
        $region56: #{tpu_custom_call.1} parent=47 // pred_fallthru
          _
        // Predicated region
        $region57: #{tpu_custom_call.1} parent=47 // pred_check
          %p387 = pneg %p130
        $region58: #{tpu_custom_call.1} parent=47 // pred_check_branch
          %389 = sbr.rel (%p387) target = $region60
        $region59: #{tpu_custom_call.1} parent=47 // pred_region
          %390 = dma.done [#allocation6], 1024
        $region60: #{tpu_custom_call.1} parent=47 // pred_fallthru
          _
        // Predicated region
        $region61: #{tpu_custom_call.1} parent=47 // pred_check
          %p391 = pneg %p172
        $region62: #{tpu_custom_call.1} parent=47 // pred_check_branch
          %393 = sbr.rel (%p391) target = $region64
        $region63: #{tpu_custom_call.1} parent=47 // pred_region
          %394 = dma.done [#allocation9], 1024
        $region64: #{tpu_custom_call.1} parent=47 // pred_fallthru
          _
        %s395 = sand.u32 %s54, 1
        %s396 = scalar_lea.sflag [#allocation3], %s395
        %s397 = sand.u32 %s54, 1
        %s398 = smul.addr %s397, 128
        %s399 = scalar_lea.vmem [#allocation2], %s398
        %p400 = pneg %p67
        %p401 = pneg %p64
        %p402 = pneg %p88
        %p403 = pneg %p85
        %p404 = pneg %p109
        %p405 = pneg %p106
        %p406 = pneg %p130
        %p407 = pneg %p127
        %p408 = pneg %p151
        %p409 = pneg %p148
        %p410 = pneg %p172
        %p411 = pneg %p169
        %p412 = pneg %p193
        %p413 = pneg %p190
        %p414 = pneg %p221
        %p415 = pneg %p218
        %s416 = sand.u32 %s208, 1
        %s417 = scalar_lea.sflag [#allocation4], %s416
        %s418 = sand.u32 %s208, 1
        %s419 = smul.addr %s418, 64
        %s420 = scalar_lea.vmem [#allocation10], %s419
        %p421 = pneg %p249
        %p422 = pneg %p246
        %s423 = sand.u32 %s32, 1
        %s424 = scalar_lea.sflag [#allocation12], %s423
        %s425 = sand.u32 %s236, 1
        %s426 = smul.addr %s425, 64
        %s427 = scalar_lea.vmem [#allocation11], %s426
        %p428 = pneg %p277
        %p429 = pneg %p274
        %s430 = sand.u32 %s32, 1
        %s431 = scalar_lea.sflag [#allocation12], %s430
        %s432 = sand.u32 %s264, 1
        %s433 = smul.addr %s432, 64
        %s434 = scalar_lea.vmem [#allocation13], %s433
        %s435 = smul.u32 16, %s37
        %s436 = smul.u32 16, %s37
        %s437 = smul.u32 16, %s37
        %s438 = smul.u32 16, %s37
        %v440 = vld [vmem:[%s378] sm:$0xff]
        %v441 = vld [vmem:[%s378 + $0x8] sm:$0xff]
        %v442 = vld [vmem:[%s378 + $0x10] sm:$0xff]
        %v443 = vld [vmem:[%s378 + $0x18] sm:$0xff]
        %v444 = vld [vmem:[%s378 + $0x20] sm:$0xff]
        %v445 = vld [vmem:[%s378 + $0x28] sm:$0xff]
        %v446 = vld [vmem:[%s378 + $0x30] sm:$0xff]
        %v447 = vld [vmem:[%s378 + $0x38] sm:$0xff]
        %v448 = vld [vmem:[%s378 + $0x40] sm:$0xff]
        %v449 = vld [vmem:[%s378 + $0x48] sm:$0xff]
        %v450 = vld [vmem:[%s378 + $0x50] sm:$0xff]
        %v451 = vld [vmem:[%s378 + $0x58] sm:$0xff]
        %v452 = vld [vmem:[%s378 + $0x60] sm:$0xff]
        %v453 = vld [vmem:[%s378 + $0x68] sm:$0xff]
        %v454 = vld [vmem:[%s378 + $0x70] sm:$0xff]
        %v455 = vld [vmem:[%s378 + $0x78] sm:$0xff]
        %456 = vadd.xlane.f32.xlu0 %v440
        %v457 = vpop.xlane.xlu0 %456
        %458 = vadd.xlane.f32.xlu0 %v441
        %v459 = vpop.xlane.xlu0 %458
        %460 = vadd.xlane.f32.xlu0 %v442
        %v461 = vpop.xlane.xlu0 %460
        %462 = vadd.xlane.f32.xlu0 %v443
        %v463 = vpop.xlane.xlu0 %462
        %464 = vadd.xlane.f32.xlu0 %v444
        %v465 = vpop.xlane.xlu0 %464
        %466 = vadd.xlane.f32.xlu0 %v445
        %v467 = vpop.xlane.xlu0 %466
        %468 = vadd.xlane.f32.xlu0 %v446
        %v469 = vpop.xlane.xlu0 %468
        %470 = vadd.xlane.f32.xlu0 %v447
        %v471 = vpop.xlane.xlu0 %470
        %472 = vadd.xlane.f32.xlu0 %v448
        %v473 = vpop.xlane.xlu0 %472
        %474 = vadd.xlane.f32.xlu0 %v449
        %v475 = vpop.xlane.xlu0 %474
        %476 = vadd.xlane.f32.xlu0 %v450
        %v477 = vpop.xlane.xlu0 %476
        %478 = vadd.xlane.f32.xlu0 %v451
        %v479 = vpop.xlane.xlu0 %478
        %480 = vadd.xlane.f32.xlu0 %v452
        %v481 = vpop.xlane.xlu0 %480
        %482 = vadd.xlane.f32.xlu0 %v453
        %v483 = vpop.xlane.xlu0 %482
        %484 = vadd.xlane.f32.xlu0 %v454
        %v485 = vpop.xlane.xlu0 %484
        %486 = vadd.xlane.f32.xlu0 %v455
        %v487 = vpop.xlane.xlu0 %486
        %v488 = vrcp.pop 128.0
        %v489 = vmul.f32 %v457, %v488
        %v490 = vmul.f32 %v459, %v488
        %v491 = vmul.f32 %v461, %v488
        %v492 = vmul.f32 %v463, %v488
        %v493 = vmul.f32 %v465, %v488
        %v494 = vmul.f32 %v467, %v488
        %v495 = vmul.f32 %v469, %v488
        %v496 = vmul.f32 %v471, %v488
        %v497 = vmul.f32 %v473, %v488
        %v498 = vmul.f32 %v475, %v488
        %v499 = vmul.f32 %v477, %v488
        %v500 = vmul.f32 %v479, %v488
        %v501 = vmul.f32 %v481, %v488
        %v502 = vmul.f32 %v483, %v488
        %v503 = vmul.f32 %v485, %v488
        %v504 = vmul.f32 %v487, %v488
        %v505 = vsub.f32 %v440, %v489
        %v506 = vsub.f32 %v441, %v490
        %v507 = vsub.f32 %v442, %v491
        %v508 = vsub.f32 %v443, %v492
        %v509 = vsub.f32 %v444, %v493
        %v510 = vsub.f32 %v445, %v494
        %v511 = vsub.f32 %v446, %v495
        %v512 = vsub.f32 %v447, %v496
        %v513 = vsub.f32 %v448, %v497
        %v514 = vsub.f32 %v449, %v498
        %v515 = vsub.f32 %v450, %v499
        %v516 = vsub.f32 %v451, %v500
        %v517 = vsub.f32 %v452, %v501
        %v518 = vsub.f32 %v453, %v502
        %v519 = vsub.f32 %v454, %v503
        %v520 = vsub.f32 %v455, %v504
        %v521 = vmul.f32 %v505, %v505
        %v522 = vmul.f32 %v506, %v506
        %v523 = vmul.f32 %v507, %v507
        %v524 = vmul.f32 %v508, %v508
        %v525 = vmul.f32 %v509, %v509
        %v526 = vmul.f32 %v510, %v510
        %v527 = vmul.f32 %v511, %v511
        %v528 = vmul.f32 %v512, %v512
        %v529 = vmul.f32 %v513, %v513
        %v530 = vmul.f32 %v514, %v514
        %v531 = vmul.f32 %v515, %v515
        %v532 = vmul.f32 %v516, %v516
        %v533 = vmul.f32 %v517, %v517
        %v534 = vmul.f32 %v518, %v518
        %v535 = vmul.f32 %v519, %v519
        %v536 = vmul.f32 %v520, %v520
        %537 = vadd.xlane.f32.xlu0 %v521
        %v538 = vpop.xlane.xlu0 %537
        %539 = vadd.xlane.f32.xlu0 %v522
        %v540 = vpop.xlane.xlu0 %539
        %541 = vadd.xlane.f32.xlu0 %v523
        %v542 = vpop.xlane.xlu0 %541
        %543 = vadd.xlane.f32.xlu0 %v524
        %v544 = vpop.xlane.xlu0 %543
        %545 = vadd.xlane.f32.xlu0 %v525
        %v546 = vpop.xlane.xlu0 %545
        %547 = vadd.xlane.f32.xlu0 %v526
        %v548 = vpop.xlane.xlu0 %547
        %549 = vadd.xlane.f32.xlu0 %v527
        %v550 = vpop.xlane.xlu0 %549
        %551 = vadd.xlane.f32.xlu0 %v528
        %v552 = vpop.xlane.xlu0 %551
        %553 = vadd.xlane.f32.xlu0 %v529
        %v554 = vpop.xlane.xlu0 %553
        %555 = vadd.xlane.f32.xlu0 %v530
        %v556 = vpop.xlane.xlu0 %555
        %557 = vadd.xlane.f32.xlu0 %v531
        %v558 = vpop.xlane.xlu0 %557
        %559 = vadd.xlane.f32.xlu0 %v532
        %v560 = vpop.xlane.xlu0 %559
        %561 = vadd.xlane.f32.xlu0 %v533
        %v562 = vpop.xlane.xlu0 %561
        %563 = vadd.xlane.f32.xlu0 %v534
        %v564 = vpop.xlane.xlu0 %563
        %565 = vadd.xlane.f32.xlu0 %v535
        %v566 = vpop.xlane.xlu0 %565
        %567 = vadd.xlane.f32.xlu0 %v536
        %v568 = vpop.xlane.xlu0 %567
        %v569 = vmul.f32 %v538, 0.007874016
        %v570 = vmul.f32 %v540, 0.007874016
        %v571 = vmul.f32 %v542, 0.007874016
        %v572 = vmul.f32 %v544, 0.007874016
        %v573 = vmul.f32 %v546, 0.007874016
        %v574 = vmul.f32 %v548, 0.007874016
        %v575 = vmul.f32 %v550, 0.007874016
        %v576 = vmul.f32 %v552, 0.007874016
        %v577 = vmul.f32 %v554, 0.007874016
        %v578 = vmul.f32 %v556, 0.007874016
        %v579 = vmul.f32 %v558, 0.007874016
        %v580 = vmul.f32 %v560, 0.007874016
        %v581 = vmul.f32 %v562, 0.007874016
        %v582 = vmul.f32 %v564, 0.007874016
        %v583 = vmul.f32 %v566, 0.007874016
        %v584 = vmul.f32 %v568, 0.007874016
        %v585 = vrsqrt.pop %v569
        %v586 = vmul.f32 %v569, %v585
        %vm587 = vcmp.eq.f32.partialorder %v569, inf
        %v588 = vsel %vm587, %v569, %v586
        %vm589 = vcmp.eq.f32.partialorder %v569, 0.0
        %v590 = vand.u32 %v569, 2147483648
        %v591 = vsel %vm589, %v590, %v588
        %v592 = vrsqrt.pop %v570
        %v593 = vmul.f32 %v570, %v592
        %vm594 = vcmp.eq.f32.partialorder %v570, inf
        %v595 = vsel %vm594, %v570, %v593
        %vm596 = vcmp.eq.f32.partialorder %v570, 0.0
        %v597 = vand.u32 %v570, 2147483648
        %v598 = vsel %vm596, %v597, %v595
        %v599 = vrsqrt.pop %v571
        %v600 = vmul.f32 %v571, %v599
        %vm601 = vcmp.eq.f32.partialorder %v571, inf
        %v602 = vsel %vm601, %v571, %v600
        %vm603 = vcmp.eq.f32.partialorder %v571, 0.0
        %v604 = vand.u32 %v571, 2147483648
        %v605 = vsel %vm603, %v604, %v602
        %v606 = vrsqrt.pop %v572
        %v607 = vmul.f32 %v572, %v606
        %vm608 = vcmp.eq.f32.partialorder %v572, inf
        %v609 = vsel %vm608, %v572, %v607
        %vm610 = vcmp.eq.f32.partialorder %v572, 0.0
        %v611 = vand.u32 %v572, 2147483648
        %v612 = vsel %vm610, %v611, %v609
        %v613 = vrsqrt.pop %v573
        %v614 = vmul.f32 %v573, %v613
        %vm615 = vcmp.eq.f32.partialorder %v573, inf
        %v616 = vsel %vm615, %v573, %v614
        %vm617 = vcmp.eq.f32.partialorder %v573, 0.0
        %v618 = vand.u32 %v573, 2147483648
        %v619 = vsel %vm617, %v618, %v616
        %v620 = vrsqrt.pop %v574
        %v621 = vmul.f32 %v574, %v620
        %vm622 = vcmp.eq.f32.partialorder %v574, inf
        %v623 = vsel %vm622, %v574, %v621
        %vm624 = vcmp.eq.f32.partialorder %v574, 0.0
        %v625 = vand.u32 %v574, 2147483648
        %v626 = vsel %vm624, %v625, %v623
        %v627 = vrsqrt.pop %v575
        %v628 = vmul.f32 %v575, %v627
        %vm629 = vcmp.eq.f32.partialorder %v575, inf
        %v630 = vsel %vm629, %v575, %v628
        %vm631 = vcmp.eq.f32.partialorder %v575, 0.0
        %v632 = vand.u32 %v575, 2147483648
        %v633 = vsel %vm631, %v632, %v630
        %v634 = vrsqrt.pop %v576
        %v635 = vmul.f32 %v576, %v634
        %vm636 = vcmp.eq.f32.partialorder %v576, inf
        %v637 = vsel %vm636, %v576, %v635
        %vm638 = vcmp.eq.f32.partialorder %v576, 0.0
        %v639 = vand.u32 %v576, 2147483648
        %v640 = vsel %vm638, %v639, %v637
        %v641 = vrsqrt.pop %v577
        %v642 = vmul.f32 %v577, %v641
        %vm643 = vcmp.eq.f32.partialorder %v577, inf
        %v644 = vsel %vm643, %v577, %v642
        %vm645 = vcmp.eq.f32.partialorder %v577, 0.0
        %v646 = vand.u32 %v577, 2147483648
        %v647 = vsel %vm645, %v646, %v644
        %v648 = vrsqrt.pop %v578
        %v649 = vmul.f32 %v578, %v648
        %vm650 = vcmp.eq.f32.partialorder %v578, inf
        %v651 = vsel %vm650, %v578, %v649
        %vm652 = vcmp.eq.f32.partialorder %v578, 0.0
        %v653 = vand.u32 %v578, 2147483648
        %v654 = vsel %vm652, %v653, %v651
        %v655 = vrsqrt.pop %v579
        %v656 = vmul.f32 %v579, %v655
        %vm657 = vcmp.eq.f32.partialorder %v579, inf
        %v658 = vsel %vm657, %v579, %v656
        %vm659 = vcmp.eq.f32.partialorder %v579, 0.0
        %v660 = vand.u32 %v579, 2147483648
        %v661 = vsel %vm659, %v660, %v658
        %v662 = vrsqrt.pop %v580
        %v663 = vmul.f32 %v580, %v662
        %vm664 = vcmp.eq.f32.partialorder %v580, inf
        %v665 = vsel %vm664, %v580, %v663
        %vm666 = vcmp.eq.f32.partialorder %v580, 0.0
        %v667 = vand.u32 %v580, 2147483648
        %v668 = vsel %vm666, %v667, %v665
        %v669 = vrsqrt.pop %v581
        %v670 = vmul.f32 %v581, %v669
        %vm671 = vcmp.eq.f32.partialorder %v581, inf
        %v672 = vsel %vm671, %v581, %v670
        %vm673 = vcmp.eq.f32.partialorder %v581, 0.0
        %v674 = vand.u32 %v581, 2147483648
        %v675 = vsel %vm673, %v674, %v672
        %v676 = vrsqrt.pop %v582
        %v677 = vmul.f32 %v582, %v676
        %vm678 = vcmp.eq.f32.partialorder %v582, inf
        %v679 = vsel %vm678, %v582, %v677
        %vm680 = vcmp.eq.f32.partialorder %v582, 0.0
        %v681 = vand.u32 %v582, 2147483648
        %v682 = vsel %vm680, %v681, %v679
        %v683 = vrsqrt.pop %v583
        %v684 = vmul.f32 %v583, %v683
        %vm685 = vcmp.eq.f32.partialorder %v583, inf
        %v686 = vsel %vm685, %v583, %v684
        %vm687 = vcmp.eq.f32.partialorder %v583, 0.0
        %v688 = vand.u32 %v583, 2147483648
        %v689 = vsel %vm687, %v688, %v686
        %v690 = vrsqrt.pop %v584
        %v691 = vmul.f32 %v584, %v690
        %vm692 = vcmp.eq.f32.partialorder %v584, inf
        %v693 = vsel %vm692, %v584, %v691
        %vm694 = vcmp.eq.f32.partialorder %v584, 0.0
        %v695 = vand.u32 %v584, 2147483648
        %v696 = vsel %vm694, %v695, %v693
        %v697 = vadd.f32 %v591, 1e-06
        %v698 = vadd.f32 %v598, 1e-06
        %v699 = vadd.f32 %v605, 1e-06
        %v700 = vadd.f32 %v612, 1e-06
        %v701 = vadd.f32 %v619, 1e-06
        %v702 = vadd.f32 %v626, 1e-06
        %v703 = vadd.f32 %v633, 1e-06
        %v704 = vadd.f32 %v640, 1e-06
        %v705 = vadd.f32 %v647, 1e-06
        %v706 = vadd.f32 %v654, 1e-06
        %v707 = vadd.f32 %v661, 1e-06
        %v708 = vadd.f32 %v668, 1e-06
        %v709 = vadd.f32 %v675, 1e-06
        %v710 = vadd.f32 %v682, 1e-06
        %v711 = vadd.f32 %v689, 1e-06
        %v712 = vadd.f32 %v696, 1e-06
        %v713 = vrcp.pop %v697
        %v714 = vrcp.pop %v698
        %v715 = vrcp.pop %v699
        %v716 = vrcp.pop %v700
        %v717 = vrcp.pop %v701
        %v718 = vrcp.pop %v702
        %v719 = vrcp.pop %v703
        %v720 = vrcp.pop %v704
        %v721 = vrcp.pop %v705
        %v722 = vrcp.pop %v706
        %v723 = vrcp.pop %v707
        %v724 = vrcp.pop %v708
        %v725 = vrcp.pop %v709
        %v726 = vrcp.pop %v710
        %v727 = vrcp.pop %v711
        %v728 = vrcp.pop %v712
        %v729 = vmul.f32 %v505, %v713
        %v730 = vmul.f32 %v506, %v714
        %v731 = vmul.f32 %v507, %v715
        %v732 = vmul.f32 %v508, %v716
        %v733 = vmul.f32 %v509, %v717
        %v734 = vmul.f32 %v510, %v718
        %v735 = vmul.f32 %v511, %v719
        %v736 = vmul.f32 %v512, %v720
        %v737 = vmul.f32 %v513, %v721
        %v738 = vmul.f32 %v514, %v722
        %v739 = vmul.f32 %v515, %v723
        %v740 = vmul.f32 %v516, %v724
        %v741 = vmul.f32 %v517, %v725
        %v742 = vmul.f32 %v518, %v726
        %v743 = vmul.f32 %v519, %v727
        %v744 = vmul.f32 %v520, %v728
        %v745 = vadd.f32 %v729, 1.0
        %v746 = vadd.f32 %v730, 1.0
        %v747 = vadd.f32 %v731, 1.0
        %v748 = vadd.f32 %v732, 1.0
        %v749 = vadd.f32 %v733, 1.0
        %v750 = vadd.f32 %v734, 1.0
        %v751 = vadd.f32 %v735, 1.0
        %v752 = vadd.f32 %v736, 1.0
        %v753 = vadd.f32 %v737, 1.0
        %v754 = vadd.f32 %v738, 1.0
        %v755 = vadd.f32 %v739, 1.0
        %v756 = vadd.f32 %v740, 1.0
        %v757 = vadd.f32 %v741, 1.0
        %v758 = vadd.f32 %v742, 1.0
        %v759 = vadd.f32 %v743, 1.0
        %v760 = vadd.f32 %v744, 1.0
        %v761 = vpack.c.bf16 %v746, %v745
        %v762 = vpack.c.bf16 %v748, %v747
        %v763 = vpack.c.bf16 %v750, %v749
        %v764 = vpack.c.bf16 %v752, %v751
        %v765 = vpack.c.bf16 %v754, %v753
        %v766 = vpack.c.bf16 %v756, %v755
        %v767 = vpack.c.bf16 %v758, %v757
        %v768 = vpack.c.bf16 %v760, %v759
        %v769 = vld [vmem:[#allocation5] sm:$0xf]
        %v770 = vld [vmem:[#allocation5 + $0x4] sm:$0xf]
        %v771 = vld [vmem:[#allocation5 + $0x8] sm:$0xf]
        %v772 = vld [vmem:[#allocation5 + $0xc] sm:$0xf]
        %v773 = vld [vmem:[#allocation5 + $0x10] sm:$0xf]
        %v774 = vld [vmem:[#allocation5 + $0x14] sm:$0xf]
        %v775 = vld [vmem:[#allocation5 + $0x18] sm:$0xf]
        %v776 = vld [vmem:[#allocation5 + $0x1c] sm:$0xf]
        %v777 = vld [vmem:[#allocation5 + $0x20] sm:$0xf]
        %v778 = vld [vmem:[#allocation5 + $0x24] sm:$0xf]
        %v779 = vld [vmem:[#allocation5 + $0x28] sm:$0xf]
        %v780 = vld [vmem:[#allocation5 + $0x2c] sm:$0xf]
        %v781 = vld [vmem:[#allocation5 + $0x30] sm:$0xf]
        %v782 = vld [vmem:[#allocation5 + $0x34] sm:$0xf]
        %v783 = vld [vmem:[#allocation5 + $0x38] sm:$0xf]
        %v784 = vld [vmem:[#allocation5 + $0x3c] sm:$0xf]
        %v785 = vld [vmem:[%s2] sm:$0x1]
        %v787 = vlaneseq
        %v788 = vshrl.u32 %v787, 7
        %v789 = vsub.s32 0, %v788
        %v790 = vrot.slane %v785, %v789
        %v808 = vunpack.c.l.b16 %v769
        %v809 = vunpack.c.l.b16 %v770
        %v810 = vunpack.c.l.b16 %v771
        %v811 = vunpack.c.l.b16 %v772
        %v812 = vunpack.c.l.b16 %v773
        %v813 = vunpack.c.l.b16 %v774
        %v814 = vunpack.c.l.b16 %v775
        %v815 = vunpack.c.l.b16 %v776
        %v816 = vunpack.c.l.b16 %v777
        %v817 = vunpack.c.l.b16 %v778
        %v818 = vunpack.c.l.b16 %v779
        %v819 = vunpack.c.l.b16 %v780
        %v820 = vunpack.c.l.b16 %v781
        %v821 = vunpack.c.l.b16 %v782
        %v822 = vunpack.c.l.b16 %v783
        %v823 = vunpack.c.l.b16 %v784
        %v824 = vpack.c.b16 %v809, %v808
        %v825 = vpack.c.b16 %v811, %v810
        %v826 = vpack.c.b16 %v813, %v812
        %v827 = vpack.c.b16 %v815, %v814
        %v828 = vpack.c.b16 %v817, %v816
        %v829 = vpack.c.b16 %v819, %v818
        %v830 = vpack.c.b16 %v821, %v820
        %v831 = vpack.c.b16 %v823, %v822
        %840 = vmatprep.subr.bf16.mxu0 0
        %841 = vmatpush1.bf16.msra.mxu0 %v824
        %842 = vmatprep.subr.bf16.mxu0 0
        %843 = vmatpush1.bf16.msra.mxu0 %v825
        %844 = vmatprep.subr.bf16.mxu0 0
        %845 = vmatpush1.bf16.msra.mxu0 %v826
        %846 = vmatprep.subr.bf16.mxu0 0
        %847 = vmatpush1.bf16.msra.mxu0 %v827
        %848 = vmatprep.subr.bf16.mxu0 0
        %849 = vmatpush1.bf16.msra.mxu0 %v828
        %850 = vmatprep.subr.bf16.mxu0 0
        %851 = vmatpush1.bf16.msra.mxu0 %v829
        %852 = vmatprep.subr.bf16.mxu0 0
        %853 = vmatpush1.bf16.msra.mxu0 %v830
        %854 = vmatprep.subr.bf16.mxu0 0
        %855 = vmatpush1.bf16.msra.mxu0 %v831
        %856 = vmatprep.subr.bf16.mxu0 0
        %857 = vmatpush1.bf16.msra.mxu0 0
        %858 = vmatprep.subr.bf16.mxu0 0
        %859 = vmatpush1.bf16.msra.mxu0 0
        %860 = vmatprep.subr.bf16.mxu0 0
        %861 = vmatpush1.bf16.msra.mxu0 0
        %862 = vmatprep.subr.bf16.mxu0 0
        %863 = vmatpush1.bf16.msra.mxu0 0
        %864 = vmatprep.subr.bf16.mxu0 0
        %865 = vmatpush1.bf16.msra.mxu0 0
        %866 = vmatprep.subr.bf16.mxu0 0
        %867 = vmatpush1.bf16.msra.mxu0 0
        %868 = vmatprep.subr.bf16.mxu0 0
        %869 = vmatpush1.bf16.msra.mxu0 0
        %870 = vmatprep.subr.bf16.mxu0 0
        %871 = vmatpush1.bf16.msra.mxu0 0
        %872 = vmatprep.mubr.bf16.mxu0 0
        %873 = vmatmul.mubr.bf16.gmra.mrb[0].mxu0 %v761
        %v874 = vpop.f32.mrb[0].mxu0
        %v875 = vadd.f32 %v790, %v874
        %v876 = vpop.f32.mrb[0].mxu0
        %v877 = vpop.f32.mrb[0].mxu0
        %v878 = vadd.f32 %v790, %v877
        %v879 = vpop.f32.mrb[0].mxu0
        %880 = vmatprep.mubr.bf16.mxu0 0
        %881 = vmatmul.mubr.bf16.gmra.mrb[0].mxu0 %v762
        %v882 = vpop.f32.mrb[0].mxu0
        %v883 = vadd.f32 %v790, %v882
        %v884 = vpop.f32.mrb[0].mxu0
        %v885 = vpop.f32.mrb[0].mxu0
        %v886 = vadd.f32 %v790, %v885
        %v887 = vpop.f32.mrb[0].mxu0
        %888 = vmatprep.mubr.bf16.mxu0 0
        %889 = vmatmul.mubr.bf16.gmra.mrb[0].mxu0 %v763
        %v890 = vpop.f32.mrb[0].mxu0
        %v891 = vadd.f32 %v790, %v890
        %v892 = vpop.f32.mrb[0].mxu0
        %v893 = vpop.f32.mrb[0].mxu0
        %v894 = vadd.f32 %v790, %v893
        %v895 = vpop.f32.mrb[0].mxu0
        %896 = vmatprep.mubr.bf16.mxu0 0
        %897 = vmatmul.mubr.bf16.gmra.mrb[0].mxu0 %v764
        %v898 = vpop.f32.mrb[0].mxu0
        %v899 = vadd.f32 %v790, %v898
        %v900 = vpop.f32.mrb[0].mxu0
        %v901 = vpop.f32.mrb[0].mxu0
        %v902 = vadd.f32 %v790, %v901
        %v903 = vpop.f32.mrb[0].mxu0
        %904 = vmatprep.mubr.bf16.mxu0 0
        %905 = vmatmul.mubr.bf16.gmra.mrb[0].mxu0 %v765
        %v906 = vpop.f32.mrb[0].mxu0
        %v907 = vadd.f32 %v790, %v906
        %v908 = vpop.f32.mrb[0].mxu0
        %v909 = vpop.f32.mrb[0].mxu0
        %v910 = vadd.f32 %v790, %v909
        %v911 = vpop.f32.mrb[0].mxu0
        %912 = vmatprep.mubr.bf16.mxu0 0
        %913 = vmatmul.mubr.bf16.gmra.mrb[0].mxu0 %v766
        %v914 = vpop.f32.mrb[0].mxu0
        %v915 = vadd.f32 %v790, %v914
        %v916 = vpop.f32.mrb[0].mxu0
        %v917 = vpop.f32.mrb[0].mxu0
        %v918 = vadd.f32 %v790, %v917
        %v919 = vpop.f32.mrb[0].mxu0
        %920 = vmatprep.mubr.bf16.mxu0 0
        %921 = vmatmul.mubr.bf16.gmra.mrb[0].mxu0 %v767
        %v922 = vpop.f32.mrb[0].mxu0
        %v923 = vadd.f32 %v790, %v922
        %v924 = vpop.f32.mrb[0].mxu0
        %v925 = vpop.f32.mrb[0].mxu0
        %v926 = vadd.f32 %v790, %v925
        %v927 = vpop.f32.mrb[0].mxu0
        %928 = vmatprep.mubr.bf16.mxu0 0
        %929 = vmatmul.mubr.bf16.gmra.mrb[0].mxu0 %v768
        %v930 = vpop.f32.mrb[0].mxu0
        %v931 = vadd.f32 %v790, %v930
        %v932 = vpop.f32.mrb[0].mxu0
        %v933 = vpop.f32.mrb[0].mxu0
        %v934 = vadd.f32 %v790, %v933
        %v935 = vpop.f32.mrb[0].mxu0
        %936 = vdwg.mxu0
        %v937 = vld [vmem:[#allocation7] sm:$0xf]
        %v938 = vld [vmem:[#allocation7 + $0x4] sm:$0xf]
        %v939 = vld [vmem:[#allocation7 + $0x8] sm:$0xf]
        %v940 = vld [vmem:[#allocation7 + $0xc] sm:$0xf]
        %v941 = vld [vmem:[#allocation7 + $0x10] sm:$0xf]
        %v942 = vld [vmem:[#allocation7 + $0x14] sm:$0xf]
        %v943 = vld [vmem:[#allocation7 + $0x18] sm:$0xf]
        %v944 = vld [vmem:[#allocation7 + $0x1c] sm:$0xf]
        %v945 = vld [vmem:[#allocation7 + $0x20] sm:$0xf]
        %v946 = vld [vmem:[#allocation7 + $0x24] sm:$0xf]
        %v947 = vld [vmem:[#allocation7 + $0x28] sm:$0xf]
        %v948 = vld [vmem:[#allocation7 + $0x2c] sm:$0xf]
        %v949 = vld [vmem:[#allocation7 + $0x30] sm:$0xf]
        %v950 = vld [vmem:[#allocation7 + $0x34] sm:$0xf]
        %v951 = vld [vmem:[#allocation7 + $0x38] sm:$0xf]
        %v952 = vld [vmem:[#allocation7 + $0x3c] sm:$0xf]
        %v953 = vld [vmem:[%s4] sm:$0x1]
        %v955 = vlaneseq
        %v956 = vshrl.u32 %v955, 7
        %v957 = vsub.s32 0, %v956
        %v958 = vrot.slane %v953, %v957
        %v976 = vunpack.c.l.b16 %v937
        %v977 = vunpack.c.l.b16 %v938
        %v978 = vunpack.c.l.b16 %v939
        %v979 = vunpack.c.l.b16 %v940
        %v980 = vunpack.c.l.b16 %v941
        %v981 = vunpack.c.l.b16 %v942
        %v982 = vunpack.c.l.b16 %v943
        %v983 = vunpack.c.l.b16 %v944
        %v984 = vunpack.c.l.b16 %v945
        %v985 = vunpack.c.l.b16 %v946
        %v986 = vunpack.c.l.b16 %v947
        %v987 = vunpack.c.l.b16 %v948
        %v988 = vunpack.c.l.b16 %v949
        %v989 = vunpack.c.l.b16 %v950
        %v990 = vunpack.c.l.b16 %v951
        %v991 = vunpack.c.l.b16 %v952
        %v992 = vpack.c.b16 %v977, %v976
        %v993 = vpack.c.b16 %v979, %v978
        %v994 = vpack.c.b16 %v981, %v980
        %v995 = vpack.c.b16 %v983, %v982
        %v996 = vpack.c.b16 %v985, %v984
        %v997 = vpack.c.b16 %v987, %v986
        %v998 = vpack.c.b16 %v989, %v988
        %v999 = vpack.c.b16 %v991, %v990
        %1008 = vmatprep.subr.bf16.mxu0 0
        %1009 = vmatpush1.bf16.msra.mxu0 %v992
        %1010 = vmatprep.subr.bf16.mxu0 0
        %1011 = vmatpush1.bf16.msra.mxu0 %v993
        %1012 = vmatprep.subr.bf16.mxu0 0
        %1013 = vmatpush1.bf16.msra.mxu0 %v994
        %1014 = vmatprep.subr.bf16.mxu0 0
        %1015 = vmatpush1.bf16.msra.mxu0 %v995
        %1016 = vmatprep.subr.bf16.mxu0 0
        %1017 = vmatpush1.bf16.msra.mxu0 %v996
        %1018 = vmatprep.subr.bf16.mxu0 0
        %1019 = vmatpush1.bf16.msra.mxu0 %v997
        %1020 = vmatprep.subr.bf16.mxu0 0
        %1021 = vmatpush1.bf16.msra.mxu0 %v998
        %1022 = vmatprep.subr.bf16.mxu0 0
        %1023 = vmatpush1.bf16.msra.mxu0 %v999
        %1024 = vmatprep.subr.bf16.mxu0 0
        %1025 = vmatpush1.bf16.msra.mxu0 0
        %1026 = vmatprep.subr.bf16.mxu0 0
        %1027 = vmatpush1.bf16.msra.mxu0 0
        %1028 = vmatprep.subr.bf16.mxu0 0
        %1029 = vmatpush1.bf16.msra.mxu0 0
        %1030 = vmatprep.subr.bf16.mxu0 0
        %1031 = vmatpush1.bf16.msra.mxu0 0
        %1032 = vmatprep.subr.bf16.mxu0 0
        %1033 = vmatpush1.bf16.msra.mxu0 0
        %1034 = vmatprep.subr.bf16.mxu0 0
        %1035 = vmatpush1.bf16.msra.mxu0 0
        %1036 = vmatprep.subr.bf16.mxu0 0
        %1037 = vmatpush1.bf16.msra.mxu0 0
        %1038 = vmatprep.subr.bf16.mxu0 0
        %1039 = vmatpush1.bf16.msra.mxu0 0
        %1040 = vmatprep.mubr.bf16.mxu0 0
        %1041 = vmatmul.mubr.bf16.gmra.mrb[0].mxu0 %v761
        %v1042 = vpop.f32.mrb[0].mxu0
        %v1043 = vadd.f32 %v958, %v1042
        %v1044 = vpop.f32.mrb[0].mxu0
        %v1045 = vpop.f32.mrb[0].mxu0
        %v1046 = vadd.f32 %v958, %v1045
        %v1047 = vpop.f32.mrb[0].mxu0
        %1048 = vmatprep.mubr.bf16.mxu0 0
        %1049 = vmatmul.mubr.bf16.gmra.mrb[0].mxu0 %v762
        %v1050 = vpop.f32.mrb[0].mxu0
        %v1051 = vadd.f32 %v958, %v1050
        %v1052 = vpop.f32.mrb[0].mxu0
        %v1053 = vpop.f32.mrb[0].mxu0
        %v1054 = vadd.f32 %v958, %v1053
        %v1055 = vpop.f32.mrb[0].mxu0
        %1056 = vmatprep.mubr.bf16.mxu0 0
        %1057 = vmatmul.mubr.bf16.gmra.mrb[0].mxu0 %v763
        %v1058 = vpop.f32.mrb[0].mxu0
        %v1059 = vadd.f32 %v958, %v1058
        %v1060 = vpop.f32.mrb[0].mxu0
        %v1061 = vpop.f32.mrb[0].mxu0
        %v1062 = vadd.f32 %v958, %v1061
        %v1063 = vpop.f32.mrb[0].mxu0
        %1064 = vmatprep.mubr.bf16.mxu0 0
        %1065 = vmatmul.mubr.bf16.gmra.mrb[0].mxu0 %v764
        %v1066 = vpop.f32.mrb[0].mxu0
        %v1067 = vadd.f32 %v958, %v1066
        %v1068 = vpop.f32.mrb[0].mxu0
        %v1069 = vpop.f32.mrb[0].mxu0
        %v1070 = vadd.f32 %v958, %v1069
        %v1071 = vpop.f32.mrb[0].mxu0
        %1072 = vmatprep.mubr.bf16.mxu0 0
        %1073 = vmatmul.mubr.bf16.gmra.mrb[0].mxu0 %v765
        %v1074 = vpop.f32.mrb[0].mxu0
        %v1075 = vadd.f32 %v958, %v1074
        %v1076 = vpop.f32.mrb[0].mxu0
        %v1077 = vpop.f32.mrb[0].mxu0
        %v1078 = vadd.f32 %v958, %v1077
        %v1079 = vpop.f32.mrb[0].mxu0
        %1080 = vmatprep.mubr.bf16.mxu0 0
        %1081 = vmatmul.mubr.bf16.gmra.mrb[0].mxu0 %v766
        %v1082 = vpop.f32.mrb[0].mxu0
        %v1083 = vadd.f32 %v958, %v1082
        %v1084 = vpop.f32.mrb[0].mxu0
        %v1085 = vpop.f32.mrb[0].mxu0
        %v1086 = vadd.f32 %v958, %v1085
        %v1087 = vpop.f32.mrb[0].mxu0
        %1088 = vmatprep.mubr.bf16.mxu0 0
        %1089 = vmatmul.mubr.bf16.gmra.mrb[0].mxu0 %v767
        %v1090 = vpop.f32.mrb[0].mxu0
        %v1091 = vadd.f32 %v958, %v1090
        %v1092 = vpop.f32.mrb[0].mxu0
        %v1093 = vpop.f32.mrb[0].mxu0
        %v1094 = vadd.f32 %v958, %v1093
        %v1095 = vpop.f32.mrb[0].mxu0
        %1096 = vmatprep.mubr.bf16.mxu0 0
        %1097 = vmatmul.mubr.bf16.gmra.mrb[0].mxu0 %v768
        %v1098 = vpop.f32.mrb[0].mxu0
        %v1099 = vadd.f32 %v958, %v1098
        %v1100 = vpop.f32.mrb[0].mxu0
        %v1101 = vpop.f32.mrb[0].mxu0
        %v1102 = vadd.f32 %v958, %v1101
        %v1103 = vpop.f32.mrb[0].mxu0
        %1104 = vdwg.mxu0
        %v1105 = vld [vmem:[#allocation8] sm:$0xf]
        %v1106 = vld [vmem:[#allocation8 + $0x4] sm:$0xf]
        %v1107 = vld [vmem:[#allocation8 + $0x8] sm:$0xf]
        %v1108 = vld [vmem:[#allocation8 + $0xc] sm:$0xf]
        %v1109 = vld [vmem:[#allocation8 + $0x10] sm:$0xf]
        %v1110 = vld [vmem:[#allocation8 + $0x14] sm:$0xf]
        %v1111 = vld [vmem:[#allocation8 + $0x18] sm:$0xf]
        %v1112 = vld [vmem:[#allocation8 + $0x1c] sm:$0xf]
        %v1113 = vld [vmem:[#allocation8 + $0x20] sm:$0xf]
        %v1114 = vld [vmem:[#allocation8 + $0x24] sm:$0xf]
        %v1115 = vld [vmem:[#allocation8 + $0x28] sm:$0xf]
        %v1116 = vld [vmem:[#allocation8 + $0x2c] sm:$0xf]
        %v1117 = vld [vmem:[#allocation8 + $0x30] sm:$0xf]
        %v1118 = vld [vmem:[#allocation8 + $0x34] sm:$0xf]
        %v1119 = vld [vmem:[#allocation8 + $0x38] sm:$0xf]
        %v1120 = vld [vmem:[#allocation8 + $0x3c] sm:$0xf]
        %v1121 = vld [vmem:[%s6] sm:$0x1]
        %v1123 = vlaneseq
        %v1124 = vshrl.u32 %v1123, 7
        %v1125 = vsub.s32 0, %v1124
        %v1126 = vrot.slane %v1121, %v1125
        %v1144 = vunpack.c.l.b16 %v1105
        %v1145 = vunpack.c.l.b16 %v1106
        %v1146 = vunpack.c.l.b16 %v1107
        %v1147 = vunpack.c.l.b16 %v1108
        %v1148 = vunpack.c.l.b16 %v1109
        %v1149 = vunpack.c.l.b16 %v1110
        %v1150 = vunpack.c.l.b16 %v1111
        %v1151 = vunpack.c.l.b16 %v1112
        %v1152 = vunpack.c.l.b16 %v1113
        %v1153 = vunpack.c.l.b16 %v1114
        %v1154 = vunpack.c.l.b16 %v1115
        %v1155 = vunpack.c.l.b16 %v1116
        %v1156 = vunpack.c.l.b16 %v1117
        %v1157 = vunpack.c.l.b16 %v1118
        %v1158 = vunpack.c.l.b16 %v1119
        %v1159 = vunpack.c.l.b16 %v1120
        %v1160 = vpack.c.b16 %v1145, %v1144
        %v1161 = vpack.c.b16 %v1147, %v1146
        %v1162 = vpack.c.b16 %v1149, %v1148
        %v1163 = vpack.c.b16 %v1151, %v1150
        %v1164 = vpack.c.b16 %v1153, %v1152
        %v1165 = vpack.c.b16 %v1155, %v1154
        %v1166 = vpack.c.b16 %v1157, %v1156
        %v1167 = vpack.c.b16 %v1159, %v1158
        %1176 = vmatprep.subr.bf16.mxu0 0
        %1177 = vmatpush1.bf16.msra.mxu0 %v1160
        %1178 = vmatprep.subr.bf16.mxu0 0
        %1179 = vmatpush1.bf16.msra.mxu0 %v1161
        %1180 = vmatprep.subr.bf16.mxu0 0
        %1181 = vmatpush1.bf16.msra.mxu0 %v1162
        %1182 = vmatprep.subr.bf16.mxu0 0
        %1183 = vmatpush1.bf16.msra.mxu0 %v1163
        %1184 = vmatprep.subr.bf16.mxu0 0
        %1185 = vmatpush1.bf16.msra.mxu0 %v1164
        %1186 = vmatprep.subr.bf16.mxu0 0
        %1187 = vmatpush1.bf16.msra.mxu0 %v1165
        %1188 = vmatprep.subr.bf16.mxu0 0
        %1189 = vmatpush1.bf16.msra.mxu0 %v1166
        %1190 = vmatprep.subr.bf16.mxu0 0
        %1191 = vmatpush1.bf16.msra.mxu0 %v1167
        %1192 = vmatprep.subr.bf16.mxu0 0
        %1193 = vmatpush1.bf16.msra.mxu0 0
        %1194 = vmatprep.subr.bf16.mxu0 0
        %1195 = vmatpush1.bf16.msra.mxu0 0
        %1196 = vmatprep.subr.bf16.mxu0 0
        %1197 = vmatpush1.bf16.msra.mxu0 0
        %1198 = vmatprep.subr.bf16.mxu0 0
        %1199 = vmatpush1.bf16.msra.mxu0 0
        %1200 = vmatprep.subr.bf16.mxu0 0
        %1201 = vmatpush1.bf16.msra.mxu0 0
        %1202 = vmatprep.subr.bf16.mxu0 0
        %1203 = vmatpush1.bf16.msra.mxu0 0
        %1204 = vmatprep.subr.bf16.mxu0 0
        %1205 = vmatpush1.bf16.msra.mxu0 0
        %1206 = vmatprep.subr.bf16.mxu0 0
        %1207 = vmatpush1.bf16.msra.mxu0 0
        %1208 = vmatprep.mubr.bf16.mxu0 0
        %1209 = vmatmul.mubr.bf16.gmra.mrb[0].mxu0 %v761
        %v1210 = vpop.f32.mrb[0].mxu0
        %v1211 = vadd.f32 %v1126, %v1210
        %v1212 = vpop.f32.mrb[0].mxu0
        %v1213 = vpop.f32.mrb[0].mxu0
        %v1214 = vadd.f32 %v1126, %v1213
        %v1215 = vpop.f32.mrb[0].mxu0
        %1216 = vmatprep.mubr.bf16.mxu0 0
        %1217 = vmatmul.mubr.bf16.gmra.mrb[0].mxu0 %v762
        %v1218 = vpop.f32.mrb[0].mxu0
        %v1219 = vadd.f32 %v1126, %v1218
        %v1220 = vpop.f32.mrb[0].mxu0
        %v1221 = vpop.f32.mrb[0].mxu0
        %v1222 = vadd.f32 %v1126, %v1221
        %v1223 = vpop.f32.mrb[0].mxu0
        %1224 = vmatprep.mubr.bf16.mxu0 0
        %1225 = vmatmul.mubr.bf16.gmra.mrb[0].mxu0 %v763
        %v1226 = vpop.f32.mrb[0].mxu0
        %v1227 = vadd.f32 %v1126, %v1226
        %v1228 = vpop.f32.mrb[0].mxu0
        %v1229 = vpop.f32.mrb[0].mxu0
        %v1230 = vadd.f32 %v1126, %v1229
        %v1231 = vpop.f32.mrb[0].mxu0
        %1232 = vmatprep.mubr.bf16.mxu0 0
        %1233 = vmatmul.mubr.bf16.gmra.mrb[0].mxu0 %v764
        %v1234 = vpop.f32.mrb[0].mxu0
        %v1235 = vadd.f32 %v1126, %v1234
        %v1236 = vpop.f32.mrb[0].mxu0
        %v1237 = vpop.f32.mrb[0].mxu0
        %v1238 = vadd.f32 %v1126, %v1237
        %v1239 = vpop.f32.mrb[0].mxu0
        %1240 = vmatprep.mubr.bf16.mxu0 0
        %1241 = vmatmul.mubr.bf16.gmra.mrb[0].mxu0 %v765
        %v1242 = vpop.f32.mrb[0].mxu0
        %v1243 = vadd.f32 %v1126, %v1242
        %v1244 = vpop.f32.mrb[0].mxu0
        %v1245 = vpop.f32.mrb[0].mxu0
        %v1246 = vadd.f32 %v1126, %v1245
        %v1247 = vpop.f32.mrb[0].mxu0
        %1248 = vmatprep.mubr.bf16.mxu0 0
        %1249 = vmatmul.mubr.bf16.gmra.mrb[0].mxu0 %v766
        %v1250 = vpop.f32.mrb[0].mxu0
        %v1251 = vadd.f32 %v1126, %v1250
        %v1252 = vpop.f32.mrb[0].mxu0
        %v1253 = vpop.f32.mrb[0].mxu0
        %v1254 = vadd.f32 %v1126, %v1253
        %v1255 = vpop.f32.mrb[0].mxu0
        %1256 = vmatprep.mubr.bf16.mxu0 0
        %1257 = vmatmul.mubr.bf16.gmra.mrb[0].mxu0 %v767
        %v1258 = vpop.f32.mrb[0].mxu0
        %v1259 = vadd.f32 %v1126, %v1258
        %v1260 = vpop.f32.mrb[0].mxu0
        %v1261 = vpop.f32.mrb[0].mxu0
        %v1262 = vadd.f32 %v1126, %v1261
        %v1263 = vpop.f32.mrb[0].mxu0
        %1264 = vmatprep.mubr.bf16.mxu0 0
        %1265 = vmatmul.mubr.bf16.gmra.mrb[0].mxu0 %v768
        %v1266 = vpop.f32.mrb[0].mxu0
        %v1267 = vadd.f32 %v1126, %v1266
        %v1268 = vpop.f32.mrb[0].mxu0
        %v1269 = vpop.f32.mrb[0].mxu0
        %v1270 = vadd.f32 %v1126, %v1269
        %v1271 = vpop.f32.mrb[0].mxu0
        %1272 = vdwg.mxu0
        %v1273 = vpack.c.bf16 %v878, %v875
        %v1274 = vpack.c.bf16 %v886, %v883
        %v1275 = vpack.c.bf16 %v894, %v891
        %v1276 = vpack.c.bf16 %v902, %v899
        %v1277 = vpack.c.bf16 %v910, %v907
        %v1278 = vpack.c.bf16 %v918, %v915
        %v1279 = vpack.c.bf16 %v926, %v923
        %v1280 = vpack.c.bf16 %v934, %v931
        %v1289 = vunpack.c.l.b16 %v1273
        %v1290 = vunpack.c.h.b16 %v1273
        %v1291 = vunpack.c.l.b16 %v1274
        %v1292 = vunpack.c.h.b16 %v1274
        %v1293 = vunpack.c.l.b16 %v1275
        %v1294 = vunpack.c.h.b16 %v1275
        %v1295 = vunpack.c.l.b16 %v1276
        %v1296 = vunpack.c.h.b16 %v1276
        %v1297 = vunpack.c.l.b16 %v1277
        %v1298 = vunpack.c.h.b16 %v1277
        %v1299 = vunpack.c.l.b16 %v1278
        %v1300 = vunpack.c.h.b16 %v1278
        %v1301 = vunpack.c.l.b16 %v1279
        %v1302 = vunpack.c.h.b16 %v1279
        %v1303 = vunpack.c.l.b16 %v1280
        %v1304 = vunpack.c.h.b16 %v1280
        %v1305 = vpack.c.b16 %v1289, %v1289
        %v1306 = vpack.c.b16 %v1290, %v1290
        %v1307 = vpack.c.b16 %v1291, %v1291
        %v1308 = vpack.c.b16 %v1292, %v1292
        %v1309 = vpack.c.b16 %v1293, %v1293
        %v1310 = vpack.c.b16 %v1294, %v1294
        %v1311 = vpack.c.b16 %v1295, %v1295
        %v1312 = vpack.c.b16 %v1296, %v1296
        %v1313 = vpack.c.b16 %v1297, %v1297
        %v1314 = vpack.c.b16 %v1298, %v1298
        %v1315 = vpack.c.b16 %v1299, %v1299
        %v1316 = vpack.c.b16 %v1300, %v1300
        %v1317 = vpack.c.b16 %v1301, %v1301
        %v1318 = vpack.c.b16 %v1302, %v1302
        %v1319 = vpack.c.b16 %v1303, %v1303
        %v1320 = vpack.c.b16 %v1304, %v1304
        %1337 = vst [vmem:[%s420] sm:$0xf] %v1305
        %1338 = vst [vmem:[%s420 + $0x4] sm:$0xf] %v1306
        %1339 = vst [vmem:[%s420 + $0x8] sm:$0xf] %v1307
        %1340 = vst [vmem:[%s420 + $0xc] sm:$0xf] %v1308
        %1341 = vst [vmem:[%s420 + $0x10] sm:$0xf] %v1309
        %1342 = vst [vmem:[%s420 + $0x14] sm:$0xf] %v1310
        %1343 = vst [vmem:[%s420 + $0x18] sm:$0xf] %v1311
        %1344 = vst [vmem:[%s420 + $0x1c] sm:$0xf] %v1312
        %1345 = vst [vmem:[%s420 + $0x20] sm:$0xf] %v1313
        %1346 = vst [vmem:[%s420 + $0x24] sm:$0xf] %v1314
        %1347 = vst [vmem:[%s420 + $0x28] sm:$0xf] %v1315
        %1348 = vst [vmem:[%s420 + $0x2c] sm:$0xf] %v1316
        %1349 = vst [vmem:[%s420 + $0x30] sm:$0xf] %v1317
        %1350 = vst [vmem:[%s420 + $0x34] sm:$0xf] %v1318
        %1351 = vst [vmem:[%s420 + $0x38] sm:$0xf] %v1319
        %1352 = vst [vmem:[%s420 + $0x3c] sm:$0xf] %v1320
        %v1353 = vpack.c.bf16 %v1046, %v1043
        %v1354 = vpack.c.bf16 %v1054, %v1051
        %v1355 = vpack.c.bf16 %v1062, %v1059
        %v1356 = vpack.c.bf16 %v1070, %v1067
        %v1357 = vpack.c.bf16 %v1078, %v1075
        %v1358 = vpack.c.bf16 %v1086, %v1083
        %v1359 = vpack.c.bf16 %v1094, %v1091
        %v1360 = vpack.c.bf16 %v1102, %v1099
        %v1369 = vunpack.c.l.b16 %v1353
        %v1370 = vunpack.c.h.b16 %v1353
        %v1371 = vunpack.c.l.b16 %v1354
        %v1372 = vunpack.c.h.b16 %v1354
        %v1373 = vunpack.c.l.b16 %v1355
        %v1374 = vunpack.c.h.b16 %v1355
        %v1375 = vunpack.c.l.b16 %v1356
        %v1376 = vunpack.c.h.b16 %v1356
        %v1377 = vunpack.c.l.b16 %v1357
        %v1378 = vunpack.c.h.b16 %v1357
        %v1379 = vunpack.c.l.b16 %v1358
        %v1380 = vunpack.c.h.b16 %v1358
        %v1381 = vunpack.c.l.b16 %v1359
        %v1382 = vunpack.c.h.b16 %v1359
        %v1383 = vunpack.c.l.b16 %v1360
        %v1384 = vunpack.c.h.b16 %v1360
        %v1385 = vpack.c.b16 %v1369, %v1369
        %v1386 = vpack.c.b16 %v1370, %v1370
        %v1387 = vpack.c.b16 %v1371, %v1371
        %v1388 = vpack.c.b16 %v1372, %v1372
        %v1389 = vpack.c.b16 %v1373, %v1373
        %v1390 = vpack.c.b16 %v1374, %v1374
        %v1391 = vpack.c.b16 %v1375, %v1375
        %v1392 = vpack.c.b16 %v1376, %v1376
        %v1393 = vpack.c.b16 %v1377, %v1377
        %v1394 = vpack.c.b16 %v1378, %v1378
        %v1395 = vpack.c.b16 %v1379, %v1379
        %v1396 = vpack.c.b16 %v1380, %v1380
        %v1397 = vpack.c.b16 %v1381, %v1381
        %v1398 = vpack.c.b16 %v1382, %v1382
        %v1399 = vpack.c.b16 %v1383, %v1383
        %v1400 = vpack.c.b16 %v1384, %v1384
        %1417 = vst [vmem:[%s427] sm:$0xf] %v1385
        %1418 = vst [vmem:[%s427 + $0x4] sm:$0xf] %v1386
        %1419 = vst [vmem:[%s427 + $0x8] sm:$0xf] %v1387
        %1420 = vst [vmem:[%s427 + $0xc] sm:$0xf] %v1388
        %1421 = vst [vmem:[%s427 + $0x10] sm:$0xf] %v1389
        %1422 = vst [vmem:[%s427 + $0x14] sm:$0xf] %v1390
        %1423 = vst [vmem:[%s427 + $0x18] sm:$0xf] %v1391
        %1424 = vst [vmem:[%s427 + $0x1c] sm:$0xf] %v1392
        %1425 = vst [vmem:[%s427 + $0x20] sm:$0xf] %v1393
        %1426 = vst [vmem:[%s427 + $0x24] sm:$0xf] %v1394
        %1427 = vst [vmem:[%s427 + $0x28] sm:$0xf] %v1395
        %1428 = vst [vmem:[%s427 + $0x2c] sm:$0xf] %v1396
        %1429 = vst [vmem:[%s427 + $0x30] sm:$0xf] %v1397
        %1430 = vst [vmem:[%s427 + $0x34] sm:$0xf] %v1398
        %1431 = vst [vmem:[%s427 + $0x38] sm:$0xf] %v1399
        %1432 = vst [vmem:[%s427 + $0x3c] sm:$0xf] %v1400
        %v1433 = vpack.c.bf16 %v1214, %v1211
        %v1434 = vpack.c.bf16 %v1222, %v1219
        %v1435 = vpack.c.bf16 %v1230, %v1227
        %v1436 = vpack.c.bf16 %v1238, %v1235
        %v1437 = vpack.c.bf16 %v1246, %v1243
        %v1438 = vpack.c.bf16 %v1254, %v1251
        %v1439 = vpack.c.bf16 %v1262, %v1259
        %v1440 = vpack.c.bf16 %v1270, %v1267
        %v1449 = vunpack.c.l.b16 %v1433
        %v1450 = vunpack.c.h.b16 %v1433
        %v1451 = vunpack.c.l.b16 %v1434
        %v1452 = vunpack.c.h.b16 %v1434
        %v1453 = vunpack.c.l.b16 %v1435
        %v1454 = vunpack.c.h.b16 %v1435
        %v1455 = vunpack.c.l.b16 %v1436
        %v1456 = vunpack.c.h.b16 %v1436
        %v1457 = vunpack.c.l.b16 %v1437
        %v1458 = vunpack.c.h.b16 %v1437
        %v1459 = vunpack.c.l.b16 %v1438
        %v1460 = vunpack.c.h.b16 %v1438
        %v1461 = vunpack.c.l.b16 %v1439
        %v1462 = vunpack.c.h.b16 %v1439
        %v1463 = vunpack.c.l.b16 %v1440
        %v1464 = vunpack.c.h.b16 %v1440
        %v1465 = vpack.c.b16 %v1449, %v1449
        %v1466 = vpack.c.b16 %v1450, %v1450
        %v1467 = vpack.c.b16 %v1451, %v1451
        %v1468 = vpack.c.b16 %v1452, %v1452
        %v1469 = vpack.c.b16 %v1453, %v1453
        %v1470 = vpack.c.b16 %v1454, %v1454
        %v1471 = vpack.c.b16 %v1455, %v1455
        %v1472 = vpack.c.b16 %v1456, %v1456
        %v1473 = vpack.c.b16 %v1457, %v1457
        %v1474 = vpack.c.b16 %v1458, %v1458
        %v1475 = vpack.c.b16 %v1459, %v1459
        %v1476 = vpack.c.b16 %v1460, %v1460
        %v1477 = vpack.c.b16 %v1461, %v1461
        %v1478 = vpack.c.b16 %v1462, %v1462
        %v1479 = vpack.c.b16 %v1463, %v1463
        %v1480 = vpack.c.b16 %v1464, %v1464
        %1497 = vst [vmem:[%s434] sm:$0xf] %v1465
        %1498 = vst [vmem:[%s434 + $0x4] sm:$0xf] %v1466
        %1499 = vst [vmem:[%s434 + $0x8] sm:$0xf] %v1467
        %1500 = vst [vmem:[%s434 + $0xc] sm:$0xf] %v1468
        %1501 = vst [vmem:[%s434 + $0x10] sm:$0xf] %v1469
        %1502 = vst [vmem:[%s434 + $0x14] sm:$0xf] %v1470
        %1503 = vst [vmem:[%s434 + $0x18] sm:$0xf] %v1471
        %1504 = vst [vmem:[%s434 + $0x1c] sm:$0xf] %v1472
        %1505 = vst [vmem:[%s434 + $0x20] sm:$0xf] %v1473
        %1506 = vst [vmem:[%s434 + $0x24] sm:$0xf] %v1474
        %1507 = vst [vmem:[%s434 + $0x28] sm:$0xf] %v1475
        %1508 = vst [vmem:[%s434 + $0x2c] sm:$0xf] %v1476
        %1509 = vst [vmem:[%s434 + $0x30] sm:$0xf] %v1477
        %1510 = vst [vmem:[%s434 + $0x34] sm:$0xf] %v1478
        %1511 = vst [vmem:[%s434 + $0x38] sm:$0xf] %v1479
        %1512 = vst [vmem:[%s434 + $0x3c] sm:$0xf] %v1480
        %s1513 = sand.u32 %s208, 1
        %s1514 = scalar_lea.sflag [#allocation4], %s1513
        %s1515 = sand.u32 %s208, 1
        %s1516 = smul.addr %s1515, 64
        %s1517 = scalar_lea.vmem [#allocation10], %s1516
        %s1518 = sand.u32 %s32, 1
        %s1519 = scalar_lea.sflag [#allocation12], %s1518
        %s1520 = sand.u32 %s236, 1
        %s1521 = smul.addr %s1520, 64
        %s1522 = scalar_lea.vmem [#allocation11], %s1521
        %s1523 = sand.u32 %s32, 1
        %s1524 = scalar_lea.sflag [#allocation12], %s1523
        %s1525 = sand.u32 %s264, 1
        %s1526 = smul.addr %s1525, 64
        %s1527 = scalar_lea.vmem [#allocation13], %s1526
        // Predicated region
        $region65: #{tpu_custom_call.1} parent=47 // pred_check
          %p1528 = pneg %p218
        $region66: #{tpu_custom_call.1} parent=47 // pred_check_branch
          %1530 = sbr.rel (%p1528) target = $region68
        $region67: #{tpu_custom_call.1} parent=47 // pred_region
          %s1531 = smul.u32 16, %s37
          %s1533 = ssub.s32 1024, 1024
          %1534 = vsyncadd %s1514, %s1533
          %s1535 = smul.addr %s36, 32
          %s1536 = sadd.s32 %s1531, %s1535
          %s1537 = smul.addr %s1536, 64
          %s1538 = scalar_lea.hbm %s7, %s1537
          %s1539 = sshll.u32 %s1517, 4
          %s1540 = int_to_ptr.vmem [resolvable:$true] %s1539
          %1545 = dma.vmem_to_hbm [thread:$0]  %s1540, 1024, %s1538, %s1514, 64, 64, 4
        $region68: #{tpu_custom_call.1} parent=47 // pred_fallthru
          _
        // Predicated region
        $region69: #{tpu_custom_call.1} parent=47 // pred_check
          %p1546 = pneg %p246
        $region70: #{tpu_custom_call.1} parent=47 // pred_check_branch
          %1548 = sbr.rel (%p1546) target = $region72
        $region71: #{tpu_custom_call.1} parent=47 // pred_region
          %s1549 = smul.u32 16, %s37
          %s1551 = ssub.s32 1024, 1024
          %1552 = vsyncadd %s1519, %s1551
          %s1553 = smul.addr %s36, 32
          %s1554 = sadd.s32 %s1549, %s1553
          %s1555 = smul.addr %s1554, 64
          %s1556 = scalar_lea.hbm %s8, %s1555
          %s1557 = sshll.u32 %s1522, 4
          %s1558 = int_to_ptr.vmem [resolvable:$true] %s1557
          %1563 = dma.vmem_to_hbm [thread:$0]  %s1558, 1024, %s1556, %s1519, 64, 64, 4
        $region72: #{tpu_custom_call.1} parent=47 // pred_fallthru
          _
        // Predicated region
        $region73: #{tpu_custom_call.1} parent=47 // pred_check
          %p1564 = pneg %p274
        $region74: #{tpu_custom_call.1} parent=47 // pred_check_branch
          %1566 = sbr.rel (%p1564) target = $region76
        $region75: #{tpu_custom_call.1} parent=47 // pred_region
          %s1567 = smul.u32 16, %s37
          %s1569 = ssub.s32 1024, 1024
          %1570 = vsyncadd %s1524, %s1569
          %s1571 = smul.addr %s36, 32
          %s1572 = sadd.s32 %s1567, %s1571
          %s1573 = smul.addr %s1572, 64
          %s1574 = scalar_lea.hbm %s9, %s1573
          %s1575 = sshll.u32 %s1527, 4
          %s1576 = int_to_ptr.vmem [resolvable:$true] %s1575
          %1581 = dma.vmem_to_hbm [thread:$0]  %s1576, 1024, %s1574, %s1524, 64, 64, 4
        $region76: #{tpu_custom_call.1} parent=47 // pred_fallthru
          _
      $region48: #{tpu_custom_call.1} parent=5 // pred_fallthru
        _
      %p1582 = scmp.le.s32.totalorder 2, %s27
      // Predicated region
      $region77: #{tpu_custom_call.1} parent=5 // pred_check
        %p1583 = pneg %p1582
      $region78: #{tpu_custom_call.1} parent=5 // pred_check_branch
        %1585 = sbr.rel (%p1583) target = $region80
      $region79: #{tpu_custom_call.1} parent=5 // pred_region
        %s1586 = ssub.s32 %s27, 2
        // Predicated region
        $region81: #{tpu_custom_call.1} parent=79 // pred_check
          %p1587 = pneg %p224
        $region82: #{tpu_custom_call.1} parent=79 // pred_check_branch
          %1589 = sbr.rel (%p1587) target = $region84
        $region83: #{tpu_custom_call.1} parent=79 // pred_region
          %s1590 = sand.u32 %s209, 1
          %s1591 = scalar_lea.sflag [#allocation4], %s1590
          %s1592 = sand.u32 %s209, 1
          %s1593 = smul.addr %s1592, 64
          %s1594 = scalar_lea.vmem [#allocation10], %s1593
          %1595 = dma.done %s1591, 1024
        $region84: #{tpu_custom_call.1} parent=79 // pred_fallthru
          _
        // Predicated region
        $region85: #{tpu_custom_call.1} parent=79 // pred_check
          %p1596 = pneg %p252
        $region86: #{tpu_custom_call.1} parent=79 // pred_check_branch
          %1598 = sbr.rel (%p1596) target = $region88
        $region87: #{tpu_custom_call.1} parent=79 // pred_region
          %s1599 = sand.u32 %s33, 1
          %s1600 = scalar_lea.sflag [#allocation12], %s1599
          %s1601 = sand.u32 %s237, 1
          %s1602 = smul.addr %s1601, 64
          %s1603 = scalar_lea.vmem [#allocation11], %s1602
          %1604 = dma.done %s1600, 1024
        $region88: #{tpu_custom_call.1} parent=79 // pred_fallthru
          _
        // Predicated region
        $region89: #{tpu_custom_call.1} parent=79 // pred_check
          %p1605 = pneg %p280
        $region90: #{tpu_custom_call.1} parent=79 // pred_check_branch
          %1607 = sbr.rel (%p1605) target = $region92
        $region91: #{tpu_custom_call.1} parent=79 // pred_region
          %s1608 = sand.u32 %s33, 1
          %s1609 = scalar_lea.sflag [#allocation12], %s1608
          %s1610 = sand.u32 %s265, 1
          %s1611 = smul.addr %s1610, 64
          %s1612 = scalar_lea.vmem [#allocation13], %s1611
          %1613 = dma.done %s1609, 1024
        $region92: #{tpu_custom_call.1} parent=79 // pred_fallthru
          _
      $region80: #{tpu_custom_call.1} parent=5 // pred_fallthru
        _
    $region6: #{tpu_custom_call.1} parent=1 // loop_footer
      %s31 = sadd.s32 1, %s27
    $region7: #{tpu_custom_call.1} parent=1 // loop_footer_branch
      %26 = sbr.rel target = $region3
    $region8: #{tpu_custom_call.1} parent=1 // loop_exit
      _
    %1614 = vsyncpa [#allocation3], 1
    %s1615 = scalar_lea.sflag [#allocation3], 1
    %1616 = vsyncpa %s1615, 1
    %1617 = vsyncpa [#allocation6], 1
    %1618 = vsyncpa [#allocation9], 1
    %1619 = vsyncpa [#allocation4], 1
    %s1620 = scalar_lea.sflag [#allocation4], 1
    %1621 = vsyncpa %s1620, 1
    %1622 = vsyncpa [#allocation12], 1
    %s1623 = scalar_lea.sflag [#allocation12], 1
    %1624 = vsyncpa %s1623, 1

</llo_original>
